<compile_context>
chip_gen: v7x
topology: tpu7x:2x2x1
jax: 0.10.0
libtpu: 0.0.40
codegen_flags: <defaults>
</compile_context>

<pallas_src>
import math

import jax
import jax.numpy as jnp
from jax.experimental import pallas as pl
from jax.experimental.pallas import tpu as pltpu

# ---------------------------------------------------------------------------
# Problem sizes (small, consistent with the module's forward)
# ---------------------------------------------------------------------------
B = 2            # batch
NV = 16          # n_visual  (x.shape[1])
NO = 8           # n_objs    (objs.shape[1])
D = 32           # query_dim
DC = 16          # context_dim
H = 2            # n_heads
DH = 16          # d_head
HD = H * DH      # attention inner dim
FF_INNER = 4 * D # FeedForward inner dim (mult=4)
N_TOT = NV + NO
EPS = 1e-5       # nn.LayerNorm default eps


# ---------------------------------------------------------------------------
# Pallas kernel: whole batch in one shot (no grid)
# ---------------------------------------------------------------------------
def gated_attn_kernel(
    gates_ref,                # SMEM (2,)  = [tanh(alpha_attn), tanh(alpha_dense)]
    x_ref,                    # (B*NV, D)
    objs_ref,                 # (B*NO, DC)
    lin_w, lin_b,             # (DC, D), (1, D)
    wqkv, bqkv,               # (D, 3*HD), (1, 3*HD)   norm1 affine pre-folded
    wo, bo,                   # (HD, D), (1, D)
    ff1_w, ff1_b,             # (D, 2*FF_INNER), (1, 2*FF_INNER)  norm2 pre-folded
    ff2_w, ff2_b,             # (FF_INNER, D), (1, D)
    out_ref,                  # (B*NV, D)
):
    f32 = jnp.float32
    x = x_ref[...]            # (B*NV, D)
    objs = objs_ref[...]      # (B*NO, DC)

    # objs = self.linear(objs)
    objs_p = jnp.dot(objs, lin_w[...], preferred_element_type=f32) + lin_b[...]

    # torch.cat([x, objs], dim=1), batch-folded row-wise:
    # rows [b*N_TOT : b*N_TOT+NV] = visual tokens of batch b, then NO objects.
    # All pieces have row counts that are multiples of 8 -> sublane aligned.
    cat = jnp.concatenate(
        [x[0:NV], objs_p[0:NO], x[NV:2 * NV], objs_p[NO:2 * NO]], axis=0
    )                                                           # (B*N_TOT, D)

    def ln_hat(h):
        # LayerNorm without gamma/beta (affine folded into downstream weights).
        mu = jnp.mean(h, axis=-1, keepdims=True)
        c = h - mu
        var = jnp.mean(c * c, axis=-1, keepdims=True)
        return c * jax.lax.rsqrt(var + EPS)

    # norm1 + fused QKV projection (single MXU matmul)
    h1 = ln_hat(cat)
    qkv = jnp.dot(h1, wqkv[...], preferred_element_type=f32) + bqkv[...]  # (B*N_TOT, 3*HD)

    # Multi-head self-attention.  Only visual-query rows are needed because
    # the module keeps attn(...)[:, :n_visual, :].
    scale = 1.0 / math.sqrt(DH)
    vis_rows = []
    for b in range(B):                      # static loop, B=2
        r0 = b * N_TOT
        acc = jnp.zeros((NV, D), f32)
        for hh in range(H):                 # static loop, H=2
            qh = qkv[r0:r0 + NV,    hh * DH:(hh + 1) * DH]                 # (NV, DH)
            kh = qkv[r0:r0 + N_TOT, HD + hh * DH:HD + (hh + 1) * DH]       # (N_TOT, DH)
            vh = qkv[r0:r0 + N_TOT, 2 * HD + hh * DH:2 * HD + (hh + 1) * DH]
            s = jnp.dot(qh, kh.T, preferred_element_type=f32) * scale      # (NV, N_TOT)
            s = s - jnp.max(s, axis=-1, keepdims=True)
            p = jnp.exp(s)
            p = p * pl.reciprocal(jnp.sum(p, axis=-1, keepdims=True), approx=False)
            oh = jnp.dot(p, vh, preferred_element_type=f32)                # (NV, DH)
            # head-wise output projection (sum over heads inside the matmul,
            # avoids a lane-concat of head outputs)
            acc = acc + jnp.dot(oh, wo[hh * DH:(hh + 1) * DH, :],
                                preferred_element_type=f32)                # (NV, D)
        vis_rows.append(acc)
    attn_vis = jnp.concatenate(vis_rows, axis=0) + bo[...]                 # (B*NV, D)

    # x = x + tanh(alpha_attn) * attn(...)[:, :n_visual, :]
    g_attn = gates_ref[0]
    xa = x + g_attn * attn_vis

    # norm2 + GEGLU feed-forward (norm2 affine folded into ff1)
    h2 = ln_hat(xa)
    proj = jnp.dot(h2, ff1_w[...], preferred_element_type=f32) + ff1_b[...]  # (B*NV, 2*FF_INNER)
    hidden = proj[:, :FF_INNER]          # lane-tile aligned split (128 lanes each)
    gate = proj[:, FF_INNER:]
    # exact GELU (PyTorch F.gelu default, approximate='none')
    gelu_gate = 0.5 * gate * (1.0 + jax.lax.erf(gate * (1.0 / math.sqrt(2.0))))
    ff = jnp.dot(hidden * gelu_gate, ff2_w[...], preferred_element_type=f32) + ff2_b[...]

    # x = x + tanh(alpha_dense) * ff(...)
    g_dense = gates_ref[1]
    out_ref[...] = xa + g_dense * ff


# ---------------------------------------------------------------------------
# Parameter preparation: fold LayerNorm affine + QKV fusion + tanh(alpha)
# ---------------------------------------------------------------------------
def prepare_params(p):
    wqkv = jnp.concatenate([p["wq"], p["wk"], p["wv"]], axis=1)      # (D, 3*HD)
    wqkv_f = p["n1_g"].reshape(D, 1) * wqkv                          # fold gamma1
    bqkv = p["n1_b"] @ wqkv                                          # fold beta1 -> bias
    ff1_w_f = p["n2_g"].reshape(D, 1) * p["ff1_w"]                   # fold gamma2
    ff1_b_f = p["ff1_b"] + p["n2_b"] @ p["ff1_w"]                    # fold beta2
    gates = jnp.tanh(jnp.stack([p["a_attn"], p["a_dense"]]).astype(jnp.float32))  # (2,)
    return dict(
        gates=gates,
        lin_w=p["lin_w"], lin_b=p["lin_b"],
        wqkv=wqkv_f, bqkv=bqkv,
        wo=p["wo"], bo=p["bo"],
        ff1_w=ff1_w_f, ff1_b=ff1_b_f,
        ff2_w=p["ff2_w"], ff2_b=p["ff2_b"],
    )


# ---------------------------------------------------------------------------
# Wrapper
# ---------------------------------------------------------------------------
def gated_self_attention_dense(x, objs, params):
    fp = prepare_params(params)
    x2d = x.reshape(B * NV, D)
    objs2d = objs.reshape(B * NO, DC)

    smem = pl.BlockSpec(memory_space=pltpu.MemorySpace.SMEM)
    vmem = pl.BlockSpec(memory_space=pltpu.MemorySpace.VMEM)

    out2d = pl.pallas_call(
        gated_attn_kernel,
        out_shape=jax.ShapeDtypeStruct((B * NV, D), jnp.float32),
        in_specs=[smem] + [vmem] * 12,
        out_specs=vmem,
    )(
        fp["gates"], x2d, objs2d,
        fp["lin_w"], fp["lin_b"],
        fp["wqkv"], fp["bqkv"],
        fp["wo"], fp["bo"],
        fp["ff1_w"], fp["ff1_b"],
        fp["ff2_w"], fp["ff2_b"],
    )
    return out2d.reshape(B, NV, D)


# ---------------------------------------------------------------------------
# Pure-JAX reference (original, unfolded parameterization) for a sanity check
# ---------------------------------------------------------------------------
def reference(x, objs, p):
    def ln(h, g, b):
        mu = jnp.mean(h, axis=-1, keepdims=True)
        var = jnp.mean((h - mu) ** 2, axis=-1, keepdims=True)
        return (h - mu) / jnp.sqrt(var + EPS) * g + b

    objs_p = objs @ p["lin_w"] + p["lin_b"]
    cat = jnp.concatenate([x, objs_p], axis=1)
    h1 = ln(cat, p["n1_g"], p["n1_b"])
    q = h1 @ p["wq"]; k = h1 @ p["wk"]; v = h1 @ p["wv"]
    q = q.reshape(B, N_TOT, H, DH).transpose(0, 2, 1, 3)
    k = k.reshape(B, N_TOT, H, DH).transpose(0, 2, 1, 3)
    v = v.reshape(B, N_TOT, H, DH).transpose(0, 2, 1, 3)
    s = jnp.einsum("bhqd,bhkd->bhqk", q, k) / math.sqrt(DH)
    a = jax.nn.softmax(s, axis=-1)
    o = jnp.einsum("bhqk,bhkd->bhqd", a, v).transpose(0, 2, 1, 3).reshape(B, N_TOT, HD)
    attn = o @ p["wo"] + p["bo"]
    xa = x + jnp.tanh(p["a_attn"]) * attn[:, :NV, :]
    h2 = ln(xa, p["n2_g"], p["n2_b"])
    proj = h2 @ p["ff1_w"] + p["ff1_b"]
    hidden, gate = proj[..., :FF_INNER], proj[..., FF_INNER:]
    ge = hidden * (0.5 * gate * (1.0 + jax.lax.erf(gate / math.sqrt(2.0))))
    ff = ge @ p["ff2_w"] + p["ff2_b"]
    return xa + jnp.tanh(p["a_dense"]) * ff


# ---------------------------------------------------------------------------
# Deterministic parameter construction + run
# ---------------------------------------------------------------------------
def make_params(key):
    keys = jax.random.split(key, 16)
    n = lambda k, s, sc=0.05: (sc * jax.random.normal(k, s)).astype(jnp.float32)
    return {
        "lin_w": n(keys[0], (DC, D)),
        "lin_b": n(keys[1], (1, D)),
        "n1_g": jnp.ones((1, D), jnp.float32),
        "n1_b": jnp.zeros((1, D), jnp.float32),
        "wq": n(keys[2], (D, HD)),
        "wk": n(keys[3], (D, HD)),
        "wv": n(keys[4], (D, HD)),
        "wo": n(keys[5], (HD, D)),
        "bo": n(keys[6], (1, D)),
        "n2_g": jnp.ones((1, D), jnp.float32),
        "n2_b": jnp.zeros((1, D), jnp.float32),
        "ff1_w": n(keys[7], (D, 2 * FF_INNER)),
        "ff1_b": n(keys[8], (1, 2 * FF_INNER)),
        "ff2_w": n(keys[9], (FF_INNER, D)),
        "ff2_b": n(keys[10], (1, D)),
        # nn.Parameter(torch.tensor(0.0)) in the module; set nonzero so the
        # attention / FF branches actually contribute (tanh(0)=0 hides bugs).
        "a_attn": jnp.array(0.5, jnp.float32),
        "a_dense": jnp.array(0.5, jnp.float32),
    }


if __name__ == "__main__":
    key = jax.random.PRNGKey(0)
    kx, ko, kp = jax.random.split(key, 3)
    x = jax.random.normal(kx, (B, NV, D), dtype=jnp.float32)
    objs = jax.random.normal(ko, (B, NO, DC), dtype=jnp.float32)
    params = make_params(kp)

    out = jax.block_until_ready(gated_self_attention_dense(x, objs, params))
    ref = jax.block_until_ready(reference(x, objs, params))
    if not bool(jnp.allclose(out, ref, atol=1e-4, rtol=1e-4)):
        raise AssertionError("Pallas kernel does not match JAX reference")

    print("KERNEL_OK")
</pallas_src>

<mosaic_0001>
module attributes {stable_mosaic.version = 11 : i64} {
  func.func @gated_attn_kernel(%arg0: memref<2xf32, #tpu.memory_space<smem>>, %arg1: memref<32x32xf32, #tpu.memory_space<vmem>>, %arg2: memref<16x16xf32, #tpu.memory_space<vmem>>, %arg3: memref<16x32xf32, #tpu.memory_space<vmem>>, %arg4: memref<1x32xf32, #tpu.memory_space<vmem>>, %arg5: memref<32x96xf32, #tpu.memory_space<vmem>>, %arg6: memref<1x96xf32, #tpu.memory_space<vmem>>, %arg7: memref<32x32xf32, #tpu.memory_space<vmem>>, %arg8: memref<1x32xf32, #tpu.memory_space<vmem>>, %arg9: memref<32x256xf32, #tpu.memory_space<vmem>>, %arg10: memref<1x256xf32, #tpu.memory_space<vmem>>, %arg11: memref<128x32xf32, #tpu.memory_space<vmem>>, %arg12: memref<1x32xf32, #tpu.memory_space<vmem>>, %arg13: memref<32x32xf32, #tpu.memory_space<vmem>>) attributes {dimension_semantics = [], scalar_prefetch = 0 : i64, scratch_operands = 0 : i64, tpu.core_type = #tpu.core_type<tc>} {
    %c0 = arith.constant 0 : index
    %c0_0 = arith.constant 0 : index
    %0 = vector.load %arg1[%c0, %c0_0] : memref<32x32xf32, #tpu.memory_space<vmem>>, vector<32x32xf32>
    %c0_1 = arith.constant 0 : index
    %c0_2 = arith.constant 0 : index
    %1 = vector.load %arg2[%c0_1, %c0_2] : memref<16x16xf32, #tpu.memory_space<vmem>>, vector<16x16xf32>
    %c0_3 = arith.constant 0 : index
    %c0_4 = arith.constant 0 : index
    %2 = vector.load %arg3[%c0_3, %c0_4] : memref<16x32xf32, #tpu.memory_space<vmem>>, vector<16x32xf32>
    %cst = arith.constant dense<0.000000e+00> : vector<16x32xf32>
    %3 = tpu.matmul %1, %2, %cst {dimension_numbers = #tpu.dot_dimension_numbers<[1], [0], [0], [1], [0, 0, 1, 1], [], []>} : vector<16x16xf32>, vector<16x32xf32>, vector<16x32xf32> -> vector<16x32xf32>
    %c0_5 = arith.constant 0 : index
    %c0_6 = arith.constant 0 : index
    %4 = vector.load %arg4[%c0_5, %c0_6] : memref<1x32xf32, #tpu.memory_space<vmem>>, vector<1x32xf32>
    %5 = vector.broadcast %4 : vector<1x32xf32> to vector<16x32xf32>
    %6 = arith.addf %3, %5 : vector<16x32xf32>
    %7 = vector.extract_strided_slice %0 {offsets = [0, 0], sizes = [16, 32], strides = [1, 1]} : vector<32x32xf32> to vector<16x32xf32>
    %8 = vector.extract_strided_slice %6 {offsets = [0, 0], sizes = [8, 32], strides = [1, 1]} : vector<16x32xf32> to vector<8x32xf32>
    %9 = vector.extract_strided_slice %0 {offsets = [16, 0], sizes = [16, 32], strides = [1, 1]} : vector<32x32xf32> to vector<16x32xf32>
    %10 = vector.extract_strided_slice %6 {offsets = [8, 0], sizes = [8, 32], strides = [1, 1]} : vector<16x32xf32> to vector<8x32xf32>
    %11 = tpu.concatenate %7, %8, %9, %10 in 0 : vector<16x32xf32>, vector<8x32xf32>, vector<16x32xf32>, vector<8x32xf32> -> vector<48x32xf32>
    %cst_7 = arith.constant dense<0.000000e+00> : vector<48xf32>
    %12 = vector.multi_reduction <add>, %11, %cst_7 [1] : vector<48x32xf32> to vector<48xf32>
    %13 = vector.shape_cast %12 : vector<48xf32> to vector<48x1xf32>
    %cst_8 = arith.constant 3.200000e+01 : f32
    %14 = vector.broadcast %cst_8 : f32 to vector<48x1xf32>
    %15 = arith.divf %13, %14 : vector<48x1xf32>
    %16 = vector.broadcast %15 : vector<48x1xf32> to vector<48x32xf32>
    %17 = arith.subf %11, %16 : vector<48x32xf32>
    %18 = arith.mulf %17, %17 : vector<48x32xf32>
    %cst_9 = arith.constant dense<0.000000e+00> : vector<48xf32>
    %19 = vector.multi_reduction <add>, %18, %cst_9 [1] : vector<48x32xf32> to vector<48xf32>
    %20 = vector.shape_cast %19 : vector<48xf32> to vector<48x1xf32>
    %cst_10 = arith.constant 3.200000e+01 : f32
    %21 = vector.broadcast %cst_10 : f32 to vector<48x1xf32>
    %22 = arith.divf %20, %21 : vector<48x1xf32>
    %cst_11 = arith.constant 9.99999974E-6 : f32
    %23 = vector.broadcast %cst_11 : f32 to vector<48x1xf32>
    %24 = arith.addf %22, %23 : vector<48x1xf32>
    %25 = math.rsqrt %24 : vector<48x1xf32>
    %26 = vector.broadcast %25 : vector<48x1xf32> to vector<48x32xf32>
    %27 = arith.mulf %17, %26 : vector<48x32xf32>
    %c0_12 = arith.constant 0 : index
    %c0_13 = arith.constant 0 : index
    %28 = vector.load %arg5[%c0_12, %c0_13] : memref<32x96xf32, #tpu.memory_space<vmem>>, vector<32x96xf32>
    %cst_14 = arith.constant dense<0.000000e+00> : vector<48x96xf32>
    %29 = tpu.matmul %27, %28, %cst_14 {dimension_numbers = #tpu.dot_dimension_numbers<[1], [0], [0], [1], [0, 0, 1, 1], [], []>} : vector<48x32xf32>, vector<32x96xf32>, vector<48x96xf32> -> vector<48x96xf32>
    %c0_15 = arith.constant 0 : index
    %c0_16 = arith.constant 0 : index
    %30 = vector.load %arg6[%c0_15, %c0_16] : memref<1x96xf32, #tpu.memory_space<vmem>>, vector<1x96xf32>
    %31 = vector.broadcast %30 : vector<1x96xf32> to vector<48x96xf32>
    %32 = arith.addf %29, %31 : vector<48x96xf32>
    %cst_17 = arith.constant 0.000000e+00 : f32
    %33 = vector.broadcast %cst_17 : f32 to vector<16x32xf32>
    %34 = vector.extract_strided_slice %32 {offsets = [0, 0], sizes = [16, 16], strides = [1, 1]} : vector<48x96xf32> to vector<16x16xf32>
    %35 = vector.extract_strided_slice %32 {offsets = [0, 32], sizes = [24, 16], strides = [1, 1]} : vector<48x96xf32> to vector<24x16xf32>
    %36 = vector.extract_strided_slice %32 {offsets = [0, 64], sizes = [24, 16], strides = [1, 1]} : vector<48x96xf32> to vector<24x16xf32>
    %37 = tpu.transpose %35, [1, 0] : vector<24x16xf32> -> vector<16x24xf32>
    %cst_18 = arith.constant dense<0.000000e+00> : vector<16x24xf32>
    %38 = tpu.matmul %34, %37, %cst_18 {dimension_numbers = #tpu.dot_dimension_numbers<[1], [0], [0], [1], [0, 0, 1, 1], [], []>} : vector<16x16xf32>, vector<16x24xf32>, vector<16x24xf32> -> vector<16x24xf32>
    %cst_19 = arith.constant 2.500000e-01 : f32
    %39 = vector.broadcast %cst_19 : f32 to vector<16x24xf32>
    %40 = arith.mulf %38, %39 : vector<16x24xf32>
    %cst_20 = arith.constant dense<0xFF800000> : vector<16xf32>
    %41 = vector.multi_reduction <maximumf>, %40, %cst_20 [1] : vector<16x24xf32> to vector<16xf32>
    %42 = vector.shape_cast %41 : vector<16xf32> to vector<16x1xf32>
    %43 = vector.broadcast %42 : vector<16x1xf32> to vector<16x24xf32>
    %44 = arith.subf %40, %43 : vector<16x24xf32>
    %45 = math.exp %44 : vector<16x24xf32>
    %cst_21 = arith.constant dense<0.000000e+00> : vector<16xf32>
    %46 = vector.multi_reduction <add>, %45, %cst_21 [1] : vector<16x24xf32> to vector<16xf32>
    %47 = vector.shape_cast %46 : vector<16xf32> to vector<16x1xf32>
    %48 = tpu.reciprocal %47 : vector<16x1xf32> -> vector<16x1xf32>
    %49 = vector.broadcast %48 : vector<16x1xf32> to vector<16x24xf32>
    %50 = arith.mulf %45, %49 : vector<16x24xf32>
    %cst_22 = arith.constant dense<0.000000e+00> : vector<16x16xf32>
    %51 = tpu.matmul %50, %36, %cst_22 {dimension_numbers = #tpu.dot_dimension_numbers<[1], [0], [0], [1], [0, 0, 1, 1], [], []>} : vector<16x24xf32>, vector<24x16xf32>, vector<16x16xf32> -> vector<16x16xf32>
    %c0_23 = arith.constant 0 : index
    %c0_24 = arith.constant 0 : index
    %52 = vector.load %arg7[%c0_23, %c0_24] : memref<32x32xf32, #tpu.memory_space<vmem>>, vector<16x32xf32>
    %cst_25 = arith.constant dense<0.000000e+00> : vector<16x32xf32>
    %53 = tpu.matmul %51, %52, %cst_25 {dimension_numbers = #tpu.dot_dimension_numbers<[1], [0], [0], [1], [0, 0, 1, 1], [], []>} : vector<16x16xf32>, vector<16x32xf32>, vector<16x32xf32> -> vector<16x32xf32>
    %54 = arith.addf %33, %53 : vector<16x32xf32>
    %55 = vector.extract_strided_slice %32 {offsets = [0, 16], sizes = [16, 16], strides = [1, 1]} : vector<48x96xf32> to vector<16x16xf32>
    %56 = vector.extract_strided_slice %32 {offsets = [0, 48], sizes = [24, 16], strides = [1, 1]} : vector<48x96xf32> to vector<24x16xf32>
    %57 = vector.extract_strided_slice %32 {offsets = [0, 80], sizes = [24, 16], strides = [1, 1]} : vector<48x96xf32> to vector<24x16xf32>
    %58 = tpu.transpose %56, [1, 0] : vector<24x16xf32> -> vector<16x24xf32>
    %cst_26 = arith.constant dense<0.000000e+00> : vector<16x24xf32>
    %59 = tpu.matmul %55, %58, %cst_26 {dimension_numbers = #tpu.dot_dimension_numbers<[1], [0], [0], [1], [0, 0, 1, 1], [], []>} : vector<16x16xf32>, vector<16x24xf32>, vector<16x24xf32> -> vector<16x24xf32>
    %cst_27 = arith.constant 2.500000e-01 : f32
    %60 = vector.broadcast %cst_27 : f32 to vector<16x24xf32>
    %61 = arith.mulf %59, %60 : vector<16x24xf32>
    %cst_28 = arith.constant dense<0xFF800000> : vector<16xf32>
    %62 = vector.multi_reduction <maximumf>, %61, %cst_28 [1] : vector<16x24xf32> to vector<16xf32>
    %63 = vector.shape_cast %62 : vector<16xf32> to vector<16x1xf32>
    %64 = vector.broadcast %63 : vector<16x1xf32> to vector<16x24xf32>
    %65 = arith.subf %61, %64 : vector<16x24xf32>
    %66 = math.exp %65 : vector<16x24xf32>
    %cst_29 = arith.constant dense<0.000000e+00> : vector<16xf32>
    %67 = vector.multi_reduction <add>, %66, %cst_29 [1] : vector<16x24xf32> to vector<16xf32>
    %68 = vector.shape_cast %67 : vector<16xf32> to vector<16x1xf32>
    %69 = tpu.reciprocal %68 : vector<16x1xf32> -> vector<16x1xf32>
    %70 = vector.broadcast %69 : vector<16x1xf32> to vector<16x24xf32>
    %71 = arith.mulf %66, %70 : vector<16x24xf32>
    %cst_30 = arith.constant dense<0.000000e+00> : vector<16x16xf32>
    %72 = tpu.matmul %71, %57, %cst_30 {dimension_numbers = #tpu.dot_dimension_numbers<[1], [0], [0], [1], [0, 0, 1, 1], [], []>} : vector<16x24xf32>, vector<24x16xf32>, vector<16x16xf32> -> vector<16x16xf32>
    %c16 = arith.constant 16 : index
    %c0_31 = arith.constant 0 : index
    %73 = vector.load %arg7[%c16, %c0_31] : memref<32x32xf32, #tpu.memory_space<vmem>>, vector<16x32xf32>
    %cst_32 = arith.constant dense<0.000000e+00> : vector<16x32xf32>
    %74 = tpu.matmul %72, %73, %cst_32 {dimension_numbers = #tpu.dot_dimension_numbers<[1], [0], [0], [1], [0, 0, 1, 1], [], []>} : vector<16x16xf32>, vector<16x32xf32>, vector<16x32xf32> -> vector<16x32xf32>
    %75 = arith.addf %54, %74 : vector<16x32xf32>
    %cst_33 = arith.constant 0.000000e+00 : f32
    %76 = vector.broadcast %cst_33 : f32 to vector<16x32xf32>
    %77 = vector.extract_strided_slice %32 {offsets = [24, 0], sizes = [16, 16], strides = [1, 1]} : vector<48x96xf32> to vector<16x16xf32>
    %78 = vector.extract_strided_slice %32 {offsets = [24, 32], sizes = [24, 16], strides = [1, 1]} : vector<48x96xf32> to vector<24x16xf32>
    %79 = vector.extract_strided_slice %32 {offsets = [24, 64], sizes = [24, 16], strides = [1, 1]} : vector<48x96xf32> to vector<24x16xf32>
    %80 = tpu.transpose %78, [1, 0] : vector<24x16xf32> -> vector<16x24xf32>
    %cst_34 = arith.constant dense<0.000000e+00> : vector<16x24xf32>
    %81 = tpu.matmul %77, %80, %cst_34 {dimension_numbers = #tpu.dot_dimension_numbers<[1], [0], [0], [1], [0, 0, 1, 1], [], []>} : vector<16x16xf32>, vector<16x24xf32>, vector<16x24xf32> -> vector<16x24xf32>
    %cst_35 = arith.constant 2.500000e-01 : f32
    %82 = vector.broadcast %cst_35 : f32 to vector<16x24xf32>
    %83 = arith.mulf %81, %82 : vector<16x24xf32>
    %cst_36 = arith.constant dense<0xFF800000> : vector<16xf32>
    %84 = vector.multi_reduction <maximumf>, %83, %cst_36 [1] : vector<16x24xf32> to vector<16xf32>
    %85 = vector.shape_cast %84 : vector<16xf32> to vector<16x1xf32>
    %86 = vector.broadcast %85 : vector<16x1xf32> to vector<16x24xf32>
    %87 = arith.subf %83, %86 : vector<16x24xf32>
    %88 = math.exp %87 : vector<16x24xf32>
    %cst_37 = arith.constant dense<0.000000e+00> : vector<16xf32>
    %89 = vector.multi_reduction <add>, %88, %cst_37 [1] : vector<16x24xf32> to vector<16xf32>
    %90 = vector.shape_cast %89 : vector<16xf32> to vector<16x1xf32>
    %91 = tpu.reciprocal %90 : vector<16x1xf32> -> vector<16x1xf32>
    %92 = vector.broadcast %91 : vector<16x1xf32> to vector<16x24xf32>
    %93 = arith.mulf %88, %92 : vector<16x24xf32>
    %cst_38 = arith.constant dense<0.000000e+00> : vector<16x16xf32>
    %94 = tpu.matmul %93, %79, %cst_38 {dimension_numbers = #tpu.dot_dimension_numbers<[1], [0], [0], [1], [0, 0, 1, 1], [], []>} : vector<16x24xf32>, vector<24x16xf32>, vector<16x16xf32> -> vector<16x16xf32>
    %c0_39 = arith.constant 0 : index
    %c0_40 = arith.constant 0 : index
    %95 = vector.load %arg7[%c0_39, %c0_40] : memref<32x32xf32, #tpu.memory_space<vmem>>, vector<16x32xf32>
    %cst_41 = arith.constant dense<0.000000e+00> : vector<16x32xf32>
    %96 = tpu.matmul %94, %95, %cst_41 {dimension_numbers = #tpu.dot_dimension_numbers<[1], [0], [0], [1], [0, 0, 1, 1], [], []>} : vector<16x16xf32>, vector<16x32xf32>, vector<16x32xf32> -> vector<16x32xf32>
    %97 = arith.addf %76, %96 : vector<16x32xf32>
    %98 = vector.extract_strided_slice %32 {offsets = [24, 16], sizes = [16, 16], strides = [1, 1]} : vector<48x96xf32> to vector<16x16xf32>
    %99 = vector.extract_strided_slice %32 {offsets = [24, 48], sizes = [24, 16], strides = [1, 1]} : vector<48x96xf32> to vector<24x16xf32>
    %100 = vector.extract_strided_slice %32 {offsets = [24, 80], sizes = [24, 16], strides = [1, 1]} : vector<48x96xf32> to vector<24x16xf32>
    %101 = tpu.transpose %99, [1, 0] : vector<24x16xf32> -> vector<16x24xf32>
    %cst_42 = arith.constant dense<0.000000e+00> : vector<16x24xf32>
    %102 = tpu.matmul %98, %101, %cst_42 {dimension_numbers = #tpu.dot_dimension_numbers<[1], [0], [0], [1], [0, 0, 1, 1], [], []>} : vector<16x16xf32>, vector<16x24xf32>, vector<16x24xf32> -> vector<16x24xf32>
    %cst_43 = arith.constant 2.500000e-01 : f32
    %103 = vector.broadcast %cst_43 : f32 to vector<16x24xf32>
    %104 = arith.mulf %102, %103 : vector<16x24xf32>
    %cst_44 = arith.constant dense<0xFF800000> : vector<16xf32>
    %105 = vector.multi_reduction <maximumf>, %104, %cst_44 [1] : vector<16x24xf32> to vector<16xf32>
    %106 = vector.shape_cast %105 : vector<16xf32> to vector<16x1xf32>
    %107 = vector.broadcast %106 : vector<16x1xf32> to vector<16x24xf32>
    %108 = arith.subf %104, %107 : vector<16x24xf32>
    %109 = math.exp %108 : vector<16x24xf32>
    %cst_45 = arith.constant dense<0.000000e+00> : vector<16xf32>
    %110 = vector.multi_reduction <add>, %109, %cst_45 [1] : vector<16x24xf32> to vector<16xf32>
    %111 = vector.shape_cast %110 : vector<16xf32> to vector<16x1xf32>
    %112 = tpu.reciprocal %111 : vector<16x1xf32> -> vector<16x1xf32>
    %113 = vector.broadcast %112 : vector<16x1xf32> to vector<16x24xf32>
    %114 = arith.mulf %109, %113 : vector<16x24xf32>
    %cst_46 = arith.constant dense<0.000000e+00> : vector<16x16xf32>
    %115 = tpu.matmul %114, %100, %cst_46 {dimension_numbers = #tpu.dot_dimension_numbers<[1], [0], [0], [1], [0, 0, 1, 1], [], []>} : vector<16x24xf32>, vector<24x16xf32>, vector<16x16xf32> -> vector<16x16xf32>
    %c16_47 = arith.constant 16 : index
    %c0_48 = arith.constant 0 : index
    %116 = vector.load %arg7[%c16_47, %c0_48] : memref<32x32xf32, #tpu.memory_space<vmem>>, vector<16x32xf32>
    %cst_49 = arith.constant dense<0.000000e+00> : vector<16x32xf32>
    %117 = tpu.matmul %115, %116, %cst_49 {dimension_numbers = #tpu.dot_dimension_numbers<[1], [0], [0], [1], [0, 0, 1, 1], [], []>} : vector<16x16xf32>, vector<16x32xf32>, vector<16x32xf32> -> vector<16x32xf32>
    %118 = arith.addf %97, %117 : vector<16x32xf32>
    %119 = tpu.concatenate %75, %118 in 0 : vector<16x32xf32>, vector<16x32xf32> -> vector<32x32xf32>
    %c0_50 = arith.constant 0 : index
    %c0_51 = arith.constant 0 : index
    %120 = vector.load %arg8[%c0_50, %c0_51] : memref<1x32xf32, #tpu.memory_space<vmem>>, vector<1x32xf32>
    %121 = vector.broadcast %120 : vector<1x32xf32> to vector<32x32xf32>
    %122 = arith.addf %119, %121 : vector<32x32xf32>
    %c0_52 = arith.constant 0 : index
    %123 = memref.load %arg0[%c0_52] : memref<2xf32, #tpu.memory_space<smem>>
    %124 = vector.broadcast %123 : f32 to vector<32x32xf32>
    %125 = arith.mulf %124, %122 : vector<32x32xf32>
    %126 = arith.addf %0, %125 : vector<32x32xf32>
    %cst_53 = arith.constant dense<0.000000e+00> : vector<32xf32>
    %127 = vector.multi_reduction <add>, %126, %cst_53 [1] : vector<32x32xf32> to vector<32xf32>
    %128 = vector.shape_cast %127 : vector<32xf32> to vector<32x1xf32>
    %cst_54 = arith.constant 3.200000e+01 : f32
    %129 = vector.broadcast %cst_54 : f32 to vector<32x1xf32>
    %130 = arith.divf %128, %129 : vector<32x1xf32>
    %131 = vector.broadcast %130 : vector<32x1xf32> to vector<32x32xf32>
    %132 = arith.subf %126, %131 : vector<32x32xf32>
    %133 = arith.mulf %132, %132 : vector<32x32xf32>
    %cst_55 = arith.constant dense<0.000000e+00> : vector<32xf32>
    %134 = vector.multi_reduction <add>, %133, %cst_55 [1] : vector<32x32xf32> to vector<32xf32>
    %135 = vector.shape_cast %134 : vector<32xf32> to vector<32x1xf32>
    %cst_56 = arith.constant 3.200000e+01 : f32
    %136 = vector.broadcast %cst_56 : f32 to vector<32x1xf32>
    %137 = arith.divf %135, %136 : vector<32x1xf32>
    %cst_57 = arith.constant 9.99999974E-6 : f32
    %138 = vector.broadcast %cst_57 : f32 to vector<32x1xf32>
    %139 = arith.addf %137, %138 : vector<32x1xf32>
    %140 = math.rsqrt %139 : vector<32x1xf32>
    %141 = vector.broadcast %140 : vector<32x1xf32> to vector<32x32xf32>
    %142 = arith.mulf %132, %141 : vector<32x32xf32>
    %c0_58 = arith.constant 0 : index
    %c0_59 = arith.constant 0 : index
    %143 = vector.load %arg9[%c0_58, %c0_59] : memref<32x256xf32, #tpu.memory_space<vmem>>, vector<32x256xf32>
    %cst_60 = arith.constant dense<0.000000e+00> : vector<32x256xf32>
    %144 = tpu.matmul %142, %143, %cst_60 {dimension_numbers = #tpu.dot_dimension_numbers<[1], [0], [0], [1], [0, 0, 1, 1], [], []>} : vector<32x32xf32>, vector<32x256xf32>, vector<32x256xf32> -> vector<32x256xf32>
    %c0_61 = arith.constant 0 : index
    %c0_62 = arith.constant 0 : index
    %145 = vector.load %arg10[%c0_61, %c0_62] : memref<1x256xf32, #tpu.memory_space<vmem>>, vector<1x256xf32>
    %146 = vector.broadcast %145 : vector<1x256xf32> to vector<32x256xf32>
    %147 = arith.addf %144, %146 : vector<32x256xf32>
    %148 = vector.extract_strided_slice %147 {offsets = [0, 0], sizes = [32, 128], strides = [1, 1]} : vector<32x256xf32> to vector<32x128xf32>
    %149 = vector.extract_strided_slice %147 {offsets = [0, 128], sizes = [32, 128], strides = [1, 1]} : vector<32x256xf32> to vector<32x128xf32>
    %cst_63 = arith.constant 5.000000e-01 : f32
    %150 = vector.broadcast %cst_63 : f32 to vector<32x128xf32>
    %151 = arith.mulf %150, %149 : vector<32x128xf32>
    %cst_64 = arith.constant 0.707106769 : f32
    %152 = vector.broadcast %cst_64 : f32 to vector<32x128xf32>
    %153 = arith.mulf %149, %152 : vector<32x128xf32>
    %154 = math.erf %153 : vector<32x128xf32>
    %cst_65 = arith.constant 1.000000e+00 : f32
    %155 = vector.broadcast %cst_65 : f32 to vector<32x128xf32>
    %156 = arith.addf %155, %154 : vector<32x128xf32>
    %157 = arith.mulf %151, %156 : vector<32x128xf32>
    %158 = arith.mulf %148, %157 : vector<32x128xf32>
    %c0_66 = arith.constant 0 : index
    %c0_67 = arith.constant 0 : index
    %159 = vector.load %arg11[%c0_66, %c0_67] : memref<128x32xf32, #tpu.memory_space<vmem>>, vector<128x32xf32>
    %cst_68 = arith.constant dense<0.000000e+00> : vector<32x32xf32>
    %160 = tpu.matmul %158, %159, %cst_68 {dimension_numbers = #tpu.dot_dimension_numbers<[1], [0], [0], [1], [0, 0, 1, 1], [], []>} : vector<32x128xf32>, vector<128x32xf32>, vector<32x32xf32> -> vector<32x32xf32>
    %c0_69 = arith.constant 0 : index
    %c0_70 = arith.constant 0 : index
    %161 = vector.load %arg12[%c0_69, %c0_70] : memref<1x32xf32, #tpu.memory_space<vmem>>, vector<1x32xf32>
    %162 = vector.broadcast %161 : vector<1x32xf32> to vector<32x32xf32>
    %163 = arith.addf %160, %162 : vector<32x32xf32>
    %c1 = arith.constant 1 : index
    %164 = memref.load %arg0[%c1] : memref<2xf32, #tpu.memory_space<smem>>
    %165 = vector.broadcast %164 : f32 to vector<32x32xf32>
    %166 = arith.mulf %165, %163 : vector<32x32xf32>
    %167 = arith.addf %126, %166 : vector<32x32xf32>
    %c0_71 = arith.constant 0 : index
    %c0_72 = arith.constant 0 : index
    %168 = vector.load %arg13[%c0_71, %c0_72] : memref<32x32xf32, #tpu.memory_space<vmem>>, vector<32x32xf32>
    tpu.vector_store %arg13[%c0_71, %c0_72], %167 {strides = array<i32>} : memref<32x32xf32, #tpu.memory_space<vmem>>, vector<32x32xf32>,
    return
  }
}

</mosaic_0001>

<llo_original>
// kernel: tpu_custom_call.1
$region0: #{tpu_custom_call.1}
  #allocation0 [shape = 'u32[]', space=smem, size = 0x4, offset = 0x4, fixed_abs, tag = 'smem constant byte address 0x4 - core index']
  #allocation1 [shape = 'u32[144,128]{1,0:T(1,128)}', space=vmem, size = 0x12000, scoped, tag = 'internal scratch']
  %s0 = inlined_call_operand.hbm [shape: f32[2], index: 0, kind: input, shape index: {}]
  %s1 = inlined_call_operand.vmem [shape: f32[32,32], index: 1, kind: input, shape index: {}]
  %s2 = inlined_call_operand.hbm [shape: f32[16,16], index: 2, kind: input, shape index: {}]
  %s3 = inlined_call_operand.hbm [shape: f32[16,32], index: 3, kind: input, shape index: {}]
  %s4 = inlined_call_operand.vmem [shape: f32[1,32], index: 4, kind: input, shape index: {}]
  %s5 = inlined_call_operand.vmem [shape: f32[32,96], index: 5, kind: input, shape index: {}]
  %s6 = inlined_call_operand.vmem [shape: f32[1,96], index: 6, kind: input, shape index: {}]
  %s7 = inlined_call_operand.vmem [shape: f32[32,32], index: 7, kind: input, shape index: {}]
  %s8 = inlined_call_operand.vmem [shape: f32[1,32], index: 8, kind: input, shape index: {}]
  %s9 = inlined_call_operand.vmem [shape: f32[32,256], index: 9, kind: input, shape index: {}]
  %s10 = inlined_call_operand.vmem [shape: f32[1,256], index: 10, kind: input, shape index: {}]
  %s11 = inlined_call_operand.vmem [shape: f32[128,32], index: 11, kind: input, shape index: {}]
  %s12 = inlined_call_operand.vmem [shape: f32[1,32], index: 12, kind: input, shape index: {}]
  %s13 = inlined_call_operand.hbm [shape: f32[32,32], index: 13, kind: output, shape index: {}]
  %s14 = sld [smem:[#allocation0]]
  $region74: #{tpu_custom_call.1} parent=0
    _
  %s16 = ssub.s32 1, %s14
  %s17 = scalar_select 0, %s16, %s14
  $region1: #{tpu_custom_call.1} parent=0
    #allocation2 [shape = 'u8[512]{0}', space=smem, size = 0x200, scoped, tag = 'input window, operand 0, single buffered']
    #allocation3 [shape = 's32[1]{0}', space=sflag, size = 0x4, scoped, tag = 'scoped memory for tpu_custom_call.1']
    #allocation4 [shape = 's32[1]{0}', space=sflag, size = 0x4, scoped, tag = 'scoped memory for tpu_custom_call.1']
    #allocation5 [shape = 's32[1]{0}', space=sflag, size = 0x4, scoped, tag = 'scoped memory for tpu_custom_call.1']
    #allocation6 [shape = 'u8[8192]{0}', space=vmem, size = 0x2000, scoped, tag = 'input window, operand 2, single buffered']
    #allocation7 [shape = 'u8[8192]{0}', space=vmem, size = 0x2000, scoped, tag = 'input window, operand 3, single buffered']
    #allocation8 [shape = 's32[1]{0}', space=sflag, size = 0x4, scoped, tag = 'scoped memory for tpu_custom_call.1']
    #allocation9 [shape = 'u8[16384]{0}', space=vmem, size = 0x4000, scoped, tag = 'output window, operand 0, single buffered']
    %18 = vsyncpa [#allocation5], 0
    %19 = vsyncpa [#allocation3], 0
    %20 = vsyncpa [#allocation8], 0
    %21 = vsyncpa [#allocation4], 0
    // Predicated region
    $region2: #{tpu_custom_call.1} parent=1 // pred_check
      _
    $region3: #{tpu_custom_call.1} parent=1 // pred_check_branch
      %23 = sbr.rel (0) target = $region5
    $region4: #{tpu_custom_call.1} parent=1 // pred_region
      %s25 = ssub.s32 16, 16
      %26 = vsyncadd [#allocation5], %s25
      %29 = dma.hbm_to_smem %s0, 16, [#allocation2], [#allocation5]
    $region5: #{tpu_custom_call.1} parent=1 // pred_fallthru
      _
    // Predicated region
    $region6: #{tpu_custom_call.1} parent=1 // pred_check
      _
    $region7: #{tpu_custom_call.1} parent=1 // pred_check_branch
      %31 = sbr.rel (0) target = $region9
    $region8: #{tpu_custom_call.1} parent=1 // pred_region
      _
    $region9: #{tpu_custom_call.1} parent=1 // pred_fallthru
      _
    // Predicated region
    $region10: #{tpu_custom_call.1} parent=1 // pred_check
      _
    $region11: #{tpu_custom_call.1} parent=1 // pred_check_branch
      %33 = sbr.rel (0) target = $region13
    $region12: #{tpu_custom_call.1} parent=1 // pred_region
      %s35 = ssub.s32 256, 256
      %36 = vsyncadd [#allocation3], %s35
      %s37 = sshll.u32 [#allocation6], 4
      %s38 = int_to_ptr.vmem [resolvable:$true] %s37
      %43 = dma.hbm_to_vmem [thread:$0]  %s2, 256, %s38, [#allocation3], 128, 128, 8
    $region13: #{tpu_custom_call.1} parent=1 // pred_fallthru
      _
    // Predicated region
    $region14: #{tpu_custom_call.1} parent=1 // pred_check
      _
    $region15: #{tpu_custom_call.1} parent=1 // pred_check_branch
      %45 = sbr.rel (0) target = $region17
    $region16: #{tpu_custom_call.1} parent=1 // pred_region
      %s47 = ssub.s32 256, 256
      %48 = vsyncadd [#allocation8], %s47
      %s49 = sshll.u32 [#allocation7], 4
      %s50 = int_to_ptr.vmem [resolvable:$true] %s49
      %55 = dma.hbm_to_vmem [thread:$0]  %s3, 256, %s50, [#allocation8], 128, 128, 8
    $region17: #{tpu_custom_call.1} parent=1 // pred_fallthru
      _
    // Predicated region
    $region18: #{tpu_custom_call.1} parent=1 // pred_check
      _
    $region19: #{tpu_custom_call.1} parent=1 // pred_check_branch
      %57 = sbr.rel (0) target = $region21
    $region20: #{tpu_custom_call.1} parent=1 // pred_region
      _
    $region21: #{tpu_custom_call.1} parent=1 // pred_fallthru
      _
    // Predicated region
    $region22: #{tpu_custom_call.1} parent=1 // pred_check
      _
    $region23: #{tpu_custom_call.1} parent=1 // pred_check_branch
      %59 = sbr.rel (0) target = $region25
    $region24: #{tpu_custom_call.1} parent=1 // pred_region
      _
    $region25: #{tpu_custom_call.1} parent=1 // pred_fallthru
      _
    // Predicated region
    $region26: #{tpu_custom_call.1} parent=1 // pred_check
      _
    $region27: #{tpu_custom_call.1} parent=1 // pred_check_branch
      %61 = sbr.rel (0) target = $region29
    $region28: #{tpu_custom_call.1} parent=1 // pred_region
      _
    $region29: #{tpu_custom_call.1} parent=1 // pred_fallthru
      _
    // Predicated region
    $region30: #{tpu_custom_call.1} parent=1 // pred_check
      _
    $region31: #{tpu_custom_call.1} parent=1 // pred_check_branch
      %63 = sbr.rel (0) target = $region33
    $region32: #{tpu_custom_call.1} parent=1 // pred_region
      _
    $region33: #{tpu_custom_call.1} parent=1 // pred_fallthru
      _
    // Predicated region
    $region34: #{tpu_custom_call.1} parent=1 // pred_check
      _
    $region35: #{tpu_custom_call.1} parent=1 // pred_check_branch
      %65 = sbr.rel (0) target = $region37
    $region36: #{tpu_custom_call.1} parent=1 // pred_region
      _
    $region37: #{tpu_custom_call.1} parent=1 // pred_fallthru
      _
    // Predicated region
    $region38: #{tpu_custom_call.1} parent=1 // pred_check
      _
    $region39: #{tpu_custom_call.1} parent=1 // pred_check_branch
      %67 = sbr.rel (0) target = $region41
    $region40: #{tpu_custom_call.1} parent=1 // pred_region
      _
    $region41: #{tpu_custom_call.1} parent=1 // pred_fallthru
      _
    // Predicated region
    $region42: #{tpu_custom_call.1} parent=1 // pred_check
      _
    $region43: #{tpu_custom_call.1} parent=1 // pred_check_branch
      %69 = sbr.rel (0) target = $region45
    $region44: #{tpu_custom_call.1} parent=1 // pred_region
      _
    $region45: #{tpu_custom_call.1} parent=1 // pred_fallthru
      _
    // Predicated region
    $region46: #{tpu_custom_call.1} parent=1 // pred_check
      _
    $region47: #{tpu_custom_call.1} parent=1 // pred_check_branch
      %71 = sbr.rel (0) target = $region49
    $region48: #{tpu_custom_call.1} parent=1 // pred_region
      _
    $region49: #{tpu_custom_call.1} parent=1 // pred_fallthru
      _
    // Predicated region
    $region50: #{tpu_custom_call.1} parent=1 // pred_check
      _
    $region51: #{tpu_custom_call.1} parent=1 // pred_check_branch
      %73 = sbr.rel (0) target = $region53
    $region52: #{tpu_custom_call.1} parent=1 // pred_region
      _
    $region53: #{tpu_custom_call.1} parent=1 // pred_fallthru
      _
    // Predicated region
    $region54: #{tpu_custom_call.1} parent=1 // pred_check
      _
    $region55: #{tpu_custom_call.1} parent=1 // pred_check_branch
      %75 = sbr.rel (0) target = $region57
    $region56: #{tpu_custom_call.1} parent=1 // pred_region
      %76 = dma.done [#allocation5], 16
    $region57: #{tpu_custom_call.1} parent=1 // pred_fallthru
      _
    // Predicated region
    $region58: #{tpu_custom_call.1} parent=1 // pred_check
      _
    $region59: #{tpu_custom_call.1} parent=1 // pred_check_branch
      %78 = sbr.rel (0) target = $region61
    $region60: #{tpu_custom_call.1} parent=1 // pred_region
      %79 = dma.done [#allocation3], 256
    $region61: #{tpu_custom_call.1} parent=1 // pred_fallthru
      _
    // Predicated region
    $region62: #{tpu_custom_call.1} parent=1 // pred_check
      _
    $region63: #{tpu_custom_call.1} parent=1 // pred_check_branch
      %81 = sbr.rel (0) target = $region65
    $region64: #{tpu_custom_call.1} parent=1 // pred_region
      %82 = dma.done [#allocation8], 256
    $region65: #{tpu_custom_call.1} parent=1 // pred_fallthru
      _
    %83 = sfence
    %v84 = vld [vmem:[%s1] sm:$0xff]
    %v85 = vld [vmem:[%s1 + $0x8] sm:$0xff]
    %v86 = vld [vmem:[%s1 + $0x10] sm:$0xff]
    %v87 = vld [vmem:[%s1 + $0x18] sm:$0xff]
    %v88 = vld [vmem:[#allocation6] sm:$0xff]
    %v89 = vld [vmem:[#allocation6 + $0x8] sm:$0xff]
    %v90 = vld [vmem:[#allocation7] sm:$0xff]
    %v91 = vld [vmem:[#allocation7 + $0x8] sm:$0xff]
    %v92 = vld [vmem:[%s4] sm:$0x1]
    %v94 = vlaneseq
    %v95 = vshrl.u32 %v94, 7
    %v96 = vsub.s32 0, %v95
    %v97 = vrot.slane %v92, %v96
    %vm99 = vcmask 130048
    %v101 = vsel %vm99, %v88, 0
    %v104 = vsel %vm99, %v89, 0
    %106 = vmatprep.subr.mxu0 0.0
    %107 = vmatpush1.msra.mxu0 %v90
    %108 = vmatprep.subr.mxu0 0.0
    %109 = vmatpush1.msra.mxu0 %v91
    %110 = vmatprep.subr.mxu0 0.0
    %111 = vmatpush1.msra.mxu0 0.0
    %112 = vmatprep.subr.mxu0 0.0
    %113 = vmatpush1.msra.mxu0 0.0
    %114 = vmatprep.subr.mxu0 0.0
    %115 = vmatpush1.msra.mxu0 0.0
    %116 = vmatprep.subr.mxu0 0.0
    %117 = vmatpush1.msra.mxu0 0.0
    %118 = vmatprep.subr.mxu0 0.0
    %119 = vmatpush1.msra.mxu0 0.0
    %120 = vmatprep.subr.mxu0 0.0
    %121 = vmatpush1.msra.mxu0 0.0
    %122 = vmatprep.subr.mxu0 0.0
    %123 = vmatpush1.msra.mxu0 0.0
    %124 = vmatprep.subr.mxu0 0.0
    %125 = vmatpush1.msra.mxu0 0.0
    %126 = vmatprep.subr.mxu0 0.0
    %127 = vmatpush1.msra.mxu0 0.0
    %128 = vmatprep.subr.mxu0 0.0
    %129 = vmatpush1.msra.mxu0 0.0
    %130 = vmatprep.subr.mxu0 0.0
    %131 = vmatpush1.msra.mxu0 0.0
    %132 = vmatprep.subr.mxu0 0.0
    %133 = vmatpush1.msra.mxu0 0.0
    %134 = vmatprep.subr.mxu0 0.0
    %135 = vmatpush1.msra.mxu0 0.0
    %136 = vmatprep.subr.mxu0 0.0
    %137 = vmatpush1.msra.mxu0 0.0
    %138 = vmatprep.subr.mxu0 0.0
    %139 = vmatpush1.msra.mxu0 0.0
    %140 = vmatprep.subr.mxu0 0.0
    %141 = vmatpush1.msra.mxu0 0.0
    %142 = vmatprep.subr.mxu0 0.0
    %143 = vmatpush1.msra.mxu0 0.0
    %144 = vmatprep.subr.mxu0 0.0
    %145 = vmatpush1.msra.mxu0 0.0
    %146 = vmatprep.subr.mxu0 0.0
    %147 = vmatpush1.msra.mxu0 0.0
    %148 = vmatprep.subr.mxu0 0.0
    %149 = vmatpush1.msra.mxu0 0.0
    %150 = vmatprep.subr.mxu0 0.0
    %151 = vmatpush1.msra.mxu0 0.0
    %152 = vmatprep.subr.mxu0 0.0
    %153 = vmatpush1.msra.mxu0 0.0
    %154 = vmatprep.subr.mxu0 0.0
    %155 = vmatpush1.msra.mxu0 0.0
    %156 = vmatprep.subr.mxu0 0.0
    %157 = vmatpush1.msra.mxu0 0.0
    %158 = vmatprep.subr.mxu0 0.0
    %159 = vmatpush1.msra.mxu0 0.0
    %160 = vmatprep.subr.mxu0 0.0
    %161 = vmatpush1.msra.mxu0 0.0
    %162 = vmatprep.subr.mxu0 0.0
    %163 = vmatpush1.msra.mxu0 0.0
    %164 = vmatprep.subr.mxu0 0.0
    %165 = vmatpush1.msra.mxu0 0.0
    %166 = vmatprep.subr.mxu0 0.0
    %167 = vmatpush1.msra.mxu0 0.0
    %168 = vmatprep.subr.mxu0 0.0
    %169 = vmatpush1.msra.mxu0 0.0
    %170 = vmatprep.mubr.f32.mxu0 0.0
    %171 = vmatmul.mubr.f32.gmra.mrb[0].mxu0 %v101
    %v172 = vpop.f32.mrb[0].mxu0
    %v173 = vadd.f32 %v97, %v172
    %v174 = vpop.f32.mrb[0].mxu0
    %175 = vmatprep.mubr.f32.mxu0 0.0
    %176 = vmatmul.mubr.f32.gmra.mrb[0].mxu0 %v104
    %v177 = vpop.f32.mrb[0].mxu0
    %v178 = vadd.f32 %v97, %v177
    %v179 = vpop.f32.mrb[0].mxu0
    %180 = vdwg.mxu0
    %vm181 = vcmask 261120
    %v182 = vsel %vm181, %v84, 0.0
    %183 = vadd.xlane.f32.xlu0 %v182
    %v184 = vpop.xlane.xlu0 %183
    %v185 = vsel %vm181, %v85, 0.0
    %186 = vadd.xlane.f32.xlu0 %v185
    %v187 = vpop.xlane.xlu0 %186
    %v188 = vsel %vm181, %v173, 0.0
    %189 = vadd.xlane.f32.xlu0 %v188
    %v190 = vpop.xlane.xlu0 %189
    %v191 = vsel %vm181, %v86, 0.0
    %192 = vadd.xlane.f32.xlu0 %v191
    %v193 = vpop.xlane.xlu0 %192
    %v194 = vsel %vm181, %v87, 0.0
    %195 = vadd.xlane.f32.xlu0 %v194
    %v196 = vpop.xlane.xlu0 %195
    %v197 = vsel %vm181, %v178, 0.0
    %198 = vadd.xlane.f32.xlu0 %v197
    %v199 = vpop.xlane.xlu0 %198
    %v200 = vrcp.pop 32.0
    %v201 = vmul.f32 %v184, %v200
    %v202 = vmul.f32 %v187, %v200
    %v203 = vmul.f32 %v190, %v200
    %v204 = vmul.f32 %v193, %v200
    %v205 = vmul.f32 %v196, %v200
    %v206 = vmul.f32 %v199, %v200
    %v207 = vsub.f32 %v84, %v201
    %v208 = vsub.f32 %v85, %v202
    %v209 = vsub.f32 %v173, %v203
    %v210 = vsub.f32 %v86, %v204
    %v211 = vsub.f32 %v87, %v205
    %v212 = vsub.f32 %v178, %v206
    %v213 = vmul.f32 %v207, %v207
    %v214 = vmul.f32 %v208, %v208
    %v215 = vmul.f32 %v209, %v209
    %v216 = vmul.f32 %v210, %v210
    %v217 = vmul.f32 %v211, %v211
    %v218 = vmul.f32 %v212, %v212
    %v219 = vsel %vm181, %v213, 0.0
    %220 = vadd.xlane.f32.xlu0 %v219
    %v221 = vpop.xlane.xlu0 %220
    %v222 = vsel %vm181, %v214, 0.0
    %223 = vadd.xlane.f32.xlu0 %v222
    %v224 = vpop.xlane.xlu0 %223
    %v225 = vsel %vm181, %v215, 0.0
    %226 = vadd.xlane.f32.xlu0 %v225
    %v227 = vpop.xlane.xlu0 %226
    %v228 = vsel %vm181, %v216, 0.0
    %229 = vadd.xlane.f32.xlu0 %v228
    %v230 = vpop.xlane.xlu0 %229
    %v231 = vsel %vm181, %v217, 0.0
    %232 = vadd.xlane.f32.xlu0 %v231
    %v233 = vpop.xlane.xlu0 %232
    %v234 = vsel %vm181, %v218, 0.0
    %235 = vadd.xlane.f32.xlu0 %v234
    %v236 = vpop.xlane.xlu0 %235
    %v237 = vmul.f32 %v221, %v200
    %v238 = vmul.f32 %v224, %v200
    %v239 = vmul.f32 %v227, %v200
    %v240 = vmul.f32 %v230, %v200
    %v241 = vmul.f32 %v233, %v200
    %v242 = vmul.f32 %v236, %v200
    %v243 = vadd.f32 %v237, 1e-05
    %v244 = vadd.f32 %v238, 1e-05
    %v245 = vadd.f32 %v239, 1e-05
    %v246 = vadd.f32 %v240, 1e-05
    %v247 = vadd.f32 %v241, 1e-05
    %v248 = vadd.f32 %v242, 1e-05
    %v249 = vrsqrt.pop %v243
    %v250 = vrsqrt.pop %v244
    %v251 = vrsqrt.pop %v245
    %v252 = vrsqrt.pop %v246
    %v253 = vrsqrt.pop %v247
    %v254 = vrsqrt.pop %v248
    %v255 = vmul.f32 %v207, %v249
    %v256 = vmul.f32 %v208, %v250
    %v257 = vmul.f32 %v209, %v251
    %v258 = vmul.f32 %v210, %v252
    %v259 = vmul.f32 %v211, %v253
    %v260 = vmul.f32 %v212, %v254
    %v261 = vld [vmem:[%s5] sm:$0xff]
    %v262 = vld [vmem:[%s5 + $0x8] sm:$0xff]
    %v263 = vld [vmem:[%s5 + $0x10] sm:$0xff]
    %v264 = vld [vmem:[%s5 + $0x18] sm:$0xff]
    %v265 = vld [vmem:[%s6] sm:$0x1]
    %v267 = vlaneseq
    %v268 = vshrl.u32 %v267, 7
    %v269 = vsub.s32 0, %v268
    %v270 = vrot.slane %v265, %v269
    %v273 = vsel %vm181, %v255, 0
    %v276 = vsel %vm181, %v256, 0
    %v279 = vsel %vm181, %v257, 0
    %v282 = vsel %vm181, %v258, 0
    %v285 = vsel %vm181, %v259, 0
    %v288 = vsel %vm181, %v260, 0
    %290 = vmatprep.subr.mxu0 0.0
    %291 = vmatpush1.msra.mxu0 %v261
    %292 = vmatprep.subr.mxu0 0.0
    %293 = vmatpush1.msra.mxu0 %v262
    %294 = vmatprep.subr.mxu0 0.0
    %295 = vmatpush1.msra.mxu0 %v263
    %296 = vmatprep.subr.mxu0 0.0
    %297 = vmatpush1.msra.mxu0 %v264
    %298 = vmatprep.subr.mxu0 0.0
    %299 = vmatpush1.msra.mxu0 0.0
    %300 = vmatprep.subr.mxu0 0.0
    %301 = vmatpush1.msra.mxu0 0.0
    %302 = vmatprep.subr.mxu0 0.0
    %303 = vmatpush1.msra.mxu0 0.0
    %304 = vmatprep.subr.mxu0 0.0
    %305 = vmatpush1.msra.mxu0 0.0
    %306 = vmatprep.subr.mxu0 0.0
    %307 = vmatpush1.msra.mxu0 0.0
    %308 = vmatprep.subr.mxu0 0.0
    %309 = vmatpush1.msra.mxu0 0.0
    %310 = vmatprep.subr.mxu0 0.0
    %311 = vmatpush1.msra.mxu0 0.0
    %312 = vmatprep.subr.mxu0 0.0
    %313 = vmatpush1.msra.mxu0 0.0
    %314 = vmatprep.subr.mxu0 0.0
    %315 = vmatpush1.msra.mxu0 0.0
    %316 = vmatprep.subr.mxu0 0.0
    %317 = vmatpush1.msra.mxu0 0.0
    %318 = vmatprep.subr.mxu0 0.0
    %319 = vmatpush1.msra.mxu0 0.0
    %320 = vmatprep.subr.mxu0 0.0
    %321 = vmatpush1.msra.mxu0 0.0
    %322 = vmatprep.subr.mxu0 0.0
    %323 = vmatpush1.msra.mxu0 0.0
    %324 = vmatprep.subr.mxu0 0.0
    %325 = vmatpush1.msra.mxu0 0.0
    %326 = vmatprep.subr.mxu0 0.0
    %327 = vmatpush1.msra.mxu0 0.0
    %328 = vmatprep.subr.mxu0 0.0
    %329 = vmatpush1.msra.mxu0 0.0
    %330 = vmatprep.subr.mxu0 0.0
    %331 = vmatpush1.msra.mxu0 0.0
    %332 = vmatprep.subr.mxu0 0.0
    %333 = vmatpush1.msra.mxu0 0.0
    %334 = vmatprep.subr.mxu0 0.0
    %335 = vmatpush1.msra.mxu0 0.0
    %336 = vmatprep.subr.mxu0 0.0
    %337 = vmatpush1.msra.mxu0 0.0
    %338 = vmatprep.subr.mxu0 0.0
    %339 = vmatpush1.msra.mxu0 0.0
    %340 = vmatprep.subr.mxu0 0.0
    %341 = vmatpush1.msra.mxu0 0.0
    %342 = vmatprep.subr.mxu0 0.0
    %343 = vmatpush1.msra.mxu0 0.0
    %344 = vmatprep.subr.mxu0 0.0
    %345 = vmatpush1.msra.mxu0 0.0
    %346 = vmatprep.subr.mxu0 0.0
    %347 = vmatpush1.msra.mxu0 0.0
    %348 = vmatprep.subr.mxu0 0.0
    %349 = vmatpush1.msra.mxu0 0.0
    %350 = vmatprep.subr.mxu0 0.0
    %351 = vmatpush1.msra.mxu0 0.0
    %352 = vmatprep.subr.mxu0 0.0
    %353 = vmatpush1.msra.mxu0 0.0
    %354 = vmatprep.mubr.f32.mxu0 0.0
    %355 = vmatmul.mubr.f32.gmra.mrb[0].mxu0 %v273
    %v356 = vpop.f32.mrb[0].mxu0
    %v357 = vadd.f32 %v270, %v356
    %v358 = vpop.f32.mrb[0].mxu0
    %359 = vmatprep.mubr.f32.mxu0 0.0
    %360 = vmatmul.mubr.f32.gmra.mrb[0].mxu0 %v276
    %v361 = vpop.f32.mrb[0].mxu0
    %v362 = vadd.f32 %v270, %v361
    %v363 = vpop.f32.mrb[0].mxu0
    %364 = vmatprep.mubr.f32.mxu0 0.0
    %365 = vmatmul.mubr.f32.gmra.mrb[0].mxu0 %v279
    %v366 = vpop.f32.mrb[0].mxu0
    %v367 = vadd.f32 %v270, %v366
    %v368 = vpop.f32.mrb[0].mxu0
    %369 = vmatprep.mubr.f32.mxu0 0.0
    %370 = vmatmul.mubr.f32.gmra.mrb[0].mxu0 %v282
    %v371 = vpop.f32.mrb[0].mxu0
    %v372 = vadd.f32 %v270, %v371
    %v373 = vpop.f32.mrb[0].mxu0
    %374 = vmatprep.mubr.f32.mxu0 0.0
    %375 = vmatmul.mubr.f32.gmra.mrb[0].mxu0 %v285
    %v376 = vpop.f32.mrb[0].mxu0
    %v377 = vadd.f32 %v270, %v376
    %v378 = vpop.f32.mrb[0].mxu0
    %379 = vmatprep.mubr.f32.mxu0 0.0
    %380 = vmatmul.mubr.f32.gmra.mrb[0].mxu0 %v288
    %v381 = vpop.f32.mrb[0].mxu0
    %v382 = vadd.f32 %v270, %v381
    %v383 = vpop.f32.mrb[0].mxu0
    %384 = vdwg.mxu0
    %388 = vrot.lane.b32.xlu0 %v357, 96
    %v389 = vpop.permute.xlu0 %388
    %390 = vrot.lane.b32.xlu0 %v362, 96
    %v391 = vpop.permute.xlu0 %390
    %392 = vrot.lane.b32.xlu0 %v367, 96
    %v393 = vpop.permute.xlu0 %392
    %v394 = vsel %vm99, %v357, 0
    %v396 = vsel %vm99, %v362, 0
    %v398 = vsel %vm99, %v389, 0
    %v400 = vsel %vm99, %v391, 0
    %v402 = vsel %vm99, %v393, 0
    %404 = vmatprep.subr.mxu0 0.0
    %405 = vmatpush1.xpose.msra.mxu0 %v398
    %406 = vmatprep.subr.mxu0 0.0
    %407 = vmatpush1.xpose.msra.mxu0 %v400
    %408 = vmatprep.subr.mxu0 0.0
    %409 = vmatpush1.xpose.msra.mxu0 %v402
    %410 = vmatprep.subr.mxu0 0.0
    %411 = vmatpush1.xpose.msra.mxu0 0.0
    %412 = vmatprep.subr.mxu0 0.0
    %413 = vmatpush1.xpose.msra.mxu0 0.0
    %414 = vmatprep.subr.mxu0 0.0
    %415 = vmatpush1.xpose.msra.mxu0 0.0
    %416 = vmatprep.subr.mxu0 0.0
    %417 = vmatpush1.xpose.msra.mxu0 0.0
    %418 = vmatprep.subr.mxu0 0.0
    %419 = vmatpush1.xpose.msra.mxu0 0.0
    %420 = vmatprep.subr.mxu0 0.0
    %421 = vmatpush1.xpose.msra.mxu0 0.0
    %422 = vmatprep.subr.mxu0 0.0
    %423 = vmatpush1.xpose.msra.mxu0 0.0
    %424 = vmatprep.subr.mxu0 0.0
    %425 = vmatpush1.xpose.msra.mxu0 0.0
    %426 = vmatprep.subr.mxu0 0.0
    %427 = vmatpush1.xpose.msra.mxu0 0.0
    %428 = vmatprep.subr.mxu0 0.0
    %429 = vmatpush1.xpose.msra.mxu0 0.0
    %430 = vmatprep.subr.mxu0 0.0
    %431 = vmatpush1.xpose.msra.mxu0 0.0
    %432 = vmatprep.subr.mxu0 0.0
    %433 = vmatpush1.xpose.msra.mxu0 0.0
    %434 = vmatprep.subr.mxu0 0.0
    %435 = vmatpush1.xpose.msra.mxu0 0.0
    %436 = vmatprep.subr.mxu0 0.0
    %437 = vmatpush1.xpose.msra.mxu0 0.0
    %438 = vmatprep.subr.mxu0 0.0
    %439 = vmatpush1.xpose.msra.mxu0 0.0
    %440 = vmatprep.subr.mxu0 0.0
    %441 = vmatpush1.xpose.msra.mxu0 0.0
    %442 = vmatprep.subr.mxu0 0.0
    %443 = vmatpush1.xpose.msra.mxu0 0.0
    %444 = vmatprep.subr.mxu0 0.0
    %445 = vmatpush1.xpose.msra.mxu0 0.0
    %446 = vmatprep.subr.mxu0 0.0
    %447 = vmatpush1.xpose.msra.mxu0 0.0
    %448 = vmatprep.subr.mxu0 0.0
    %449 = vmatpush1.xpose.msra.mxu0 0.0
    %450 = vmatprep.subr.mxu0 0.0
    %451 = vmatpush1.xpose.msra.mxu0 0.0
    %452 = vmatprep.subr.mxu0 0.0
    %453 = vmatpush1.xpose.msra.mxu0 0.0
    %454 = vmatprep.subr.mxu0 0.0
    %455 = vmatpush1.xpose.msra.mxu0 0.0
    %456 = vmatprep.subr.mxu0 0.0
    %457 = vmatpush1.xpose.msra.mxu0 0.0
    %458 = vmatprep.subr.mxu0 0.0
    %459 = vmatpush1.xpose.msra.mxu0 0.0
    %460 = vmatprep.subr.mxu0 0.0
    %461 = vmatpush1.xpose.msra.mxu0 0.0
    %462 = vmatprep.subr.mxu0 0.0
    %463 = vmatpush1.xpose.msra.mxu0 0.0
    %464 = vmatprep.subr.mxu0 0.0
    %465 = vmatpush1.xpose.msra.mxu0 0.0
    %466 = vmatprep.subr.mxu0 0.0
    %467 = vmatpush1.xpose.msra.mxu0 0.0
    %468 = vmatprep.mubr.f32.mxu0 0.0
    %469 = vmatmul.mubr.f32.gmra.mrb[0].mxu0 %v394
    %v470 = vpop.f32.mrb[0].mxu0
    %v471 = vadd.f32 0.0, %v470
    %v472 = vpop.f32.mrb[0].mxu0
    %473 = vmatprep.mubr.f32.mxu0 0.0
    %474 = vmatmul.mubr.f32.gmra.mrb[0].mxu0 %v396
    %v475 = vpop.f32.mrb[0].mxu0
    %v476 = vadd.f32 0.0, %v475
    %v477 = vpop.f32.mrb[0].mxu0
    %478 = vdwg.mxu0
    %v479 = vmul.f32 %v471, 0.25
    %v480 = vmul.f32 %v476, 0.25
    %vm481 = vcmask 195584
    %v482 = vsel %vm481, %v479, -inf
    %483 = vmax.xlane.f32.xlu0 %v482
    %v484 = vpop.xlane.xlu0 %483
    %v485 = vsel %vm481, %v480, -inf
    %486 = vmax.xlane.f32.xlu0 %v485
    %v487 = vpop.xlane.xlu0 %486
    %v488 = vsub.f32 %v479, %v484
    %v489 = vsub.f32 %v480, %v487
    %v490 = vmul.f32 %v488, 1.442695
    %v491 = vpow.pop %v490
    %v492 = vmul.f32 %v489, 1.442695
    %v493 = vpow.pop %v492
    %v494 = vsel %vm481, %v491, 0.0
    %495 = vadd.xlane.f32.xlu0 %v494
    %v496 = vpop.xlane.xlu0 %495
    %v497 = vsel %vm481, %v493, 0.0
    %498 = vadd.xlane.f32.xlu0 %v497
    %v499 = vpop.xlane.xlu0 %498
    %v500 = vrcp.pop %v496
    %v501 = vrcp.pop %v499
    %v502 = vmul.f32 %v491, %v500
    %v503 = vmul.f32 %v493, %v501
    %504 = vrot.lane.b32.xlu0 %v357, 64
    %v505 = vpop.permute.xlu0 %504
    %506 = vrot.lane.b32.xlu0 %v362, 64
    %v507 = vpop.permute.xlu0 %506
    %508 = vrot.lane.b32.xlu0 %v367, 64
    %v509 = vpop.permute.xlu0 %508
    %v514 = vsel %vm481, %v502, 0
    %v517 = vsel %vm481, %v503, 0
    %519 = vmatprep.subr.mxu0 0.0
    %520 = vmatpush1.msra.mxu0 %v505
    %521 = vmatprep.subr.mxu0 0.0
    %522 = vmatpush1.msra.mxu0 %v507
    %523 = vmatprep.subr.mxu0 0.0
    %524 = vmatpush1.msra.mxu0 %v509
    %525 = vmatprep.subr.mxu0 0.0
    %526 = vmatpush1.msra.mxu0 0.0
    %527 = vmatprep.subr.mxu0 0.0
    %528 = vmatpush1.msra.mxu0 0.0
    %529 = vmatprep.subr.mxu0 0.0
    %530 = vmatpush1.msra.mxu0 0.0
    %531 = vmatprep.subr.mxu0 0.0
    %532 = vmatpush1.msra.mxu0 0.0
    %533 = vmatprep.subr.mxu0 0.0
    %534 = vmatpush1.msra.mxu0 0.0
    %535 = vmatprep.subr.mxu0 0.0
    %536 = vmatpush1.msra.mxu0 0.0
    %537 = vmatprep.subr.mxu0 0.0
    %538 = vmatpush1.msra.mxu0 0.0
    %539 = vmatprep.subr.mxu0 0.0
    %540 = vmatpush1.msra.mxu0 0.0
    %541 = vmatprep.subr.mxu0 0.0
    %542 = vmatpush1.msra.mxu0 0.0
    %543 = vmatprep.subr.mxu0 0.0
    %544 = vmatpush1.msra.mxu0 0.0
    %545 = vmatprep.subr.mxu0 0.0
    %546 = vmatpush1.msra.mxu0 0.0
    %547 = vmatprep.subr.mxu0 0.0
    %548 = vmatpush1.msra.mxu0 0.0
    %549 = vmatprep.subr.mxu0 0.0
    %550 = vmatpush1.msra.mxu0 0.0
    %551 = vmatprep.subr.mxu0 0.0
    %552 = vmatpush1.msra.mxu0 0.0
    %553 = vmatprep.subr.mxu0 0.0
    %554 = vmatpush1.msra.mxu0 0.0
    %555 = vmatprep.subr.mxu0 0.0
    %556 = vmatpush1.msra.mxu0 0.0
    %557 = vmatprep.subr.mxu0 0.0
    %558 = vmatpush1.msra.mxu0 0.0
    %559 = vmatprep.subr.mxu0 0.0
    %560 = vmatpush1.msra.mxu0 0.0
    %561 = vmatprep.subr.mxu0 0.0
    %562 = vmatpush1.msra.mxu0 0.0
    %563 = vmatprep.subr.mxu0 0.0
    %564 = vmatpush1.msra.mxu0 0.0
    %565 = vmatprep.subr.mxu0 0.0
    %566 = vmatpush1.msra.mxu0 0.0
    %567 = vmatprep.subr.mxu0 0.0
    %568 = vmatpush1.msra.mxu0 0.0
    %569 = vmatprep.subr.mxu0 0.0
    %570 = vmatpush1.msra.mxu0 0.0
    %571 = vmatprep.subr.mxu0 0.0
    %572 = vmatpush1.msra.mxu0 0.0
    %573 = vmatprep.subr.mxu0 0.0
    %574 = vmatpush1.msra.mxu0 0.0
    %575 = vmatprep.subr.mxu0 0.0
    %576 = vmatpush1.msra.mxu0 0.0
    %577 = vmatprep.subr.mxu0 0.0
    %578 = vmatpush1.msra.mxu0 0.0
    %579 = vmatprep.subr.mxu0 0.0
    %580 = vmatpush1.msra.mxu0 0.0
    %581 = vmatprep.subr.mxu0 0.0
    %582 = vmatpush1.msra.mxu0 0.0
    %583 = vmatprep.mubr.f32.mxu0 0.0
    %584 = vmatmul.mubr.f32.gmra.mrb[0].mxu0 %v514
    %v585 = vpop.f32.mrb[0].mxu0
    %v586 = vadd.f32 0.0, %v585
    %v587 = vpop.f32.mrb[0].mxu0
    %588 = vmatprep.mubr.f32.mxu0 0.0
    %589 = vmatmul.mubr.f32.gmra.mrb[0].mxu0 %v517
    %v590 = vpop.f32.mrb[0].mxu0
    %v591 = vadd.f32 0.0, %v590
    %v592 = vpop.f32.mrb[0].mxu0
    %593 = vdwg.mxu0
    %v594 = vld [vmem:[%s7] sm:$0xff]
    %v595 = vld [vmem:[%s7 + $0x8] sm:$0xff]
    %596 = vrot.lane.b32.xlu0 %v357, 112
    %v597 = vpop.permute.xlu0 %596
    %598 = vrot.lane.b32.xlu0 %v362, 112
    %v599 = vpop.permute.xlu0 %598
    %600 = vrot.lane.b32.xlu0 %v357, 80
    %v601 = vpop.permute.xlu0 %600
    %602 = vrot.lane.b32.xlu0 %v362, 80
    %v603 = vpop.permute.xlu0 %602
    %604 = vrot.lane.b32.xlu0 %v367, 80
    %v605 = vpop.permute.xlu0 %604
    %v606 = vsel %vm99, %v597, 0
    %v608 = vsel %vm99, %v599, 0
    %v610 = vsel %vm99, %v601, 0
    %v612 = vsel %vm99, %v603, 0
    %v614 = vsel %vm99, %v605, 0
    %616 = vmatprep.subr.mxu0 0.0
    %617 = vmatpush1.xpose.msra.mxu0 %v610
    %618 = vmatprep.subr.mxu0 0.0
    %619 = vmatpush1.xpose.msra.mxu0 %v612
    %620 = vmatprep.subr.mxu0 0.0
    %621 = vmatpush1.xpose.msra.mxu0 %v614
    %622 = vmatprep.subr.mxu0 0.0
    %623 = vmatpush1.xpose.msra.mxu0 0.0
    %624 = vmatprep.subr.mxu0 0.0
    %625 = vmatpush1.xpose.msra.mxu0 0.0
    %626 = vmatprep.subr.mxu0 0.0
    %627 = vmatpush1.xpose.msra.mxu0 0.0
    %628 = vmatprep.subr.mxu0 0.0
    %629 = vmatpush1.xpose.msra.mxu0 0.0
    %630 = vmatprep.subr.mxu0 0.0
    %631 = vmatpush1.xpose.msra.mxu0 0.0
    %632 = vmatprep.subr.mxu0 0.0
    %633 = vmatpush1.xpose.msra.mxu0 0.0
    %634 = vmatprep.subr.mxu0 0.0
    %635 = vmatpush1.xpose.msra.mxu0 0.0
    %636 = vmatprep.subr.mxu0 0.0
    %637 = vmatpush1.xpose.msra.mxu0 0.0
    %638 = vmatprep.subr.mxu0 0.0
    %639 = vmatpush1.xpose.msra.mxu0 0.0
    %640 = vmatprep.subr.mxu0 0.0
    %641 = vmatpush1.xpose.msra.mxu0 0.0
    %642 = vmatprep.subr.mxu0 0.0
    %643 = vmatpush1.xpose.msra.mxu0 0.0
    %644 = vmatprep.subr.mxu0 0.0
    %645 = vmatpush1.xpose.msra.mxu0 0.0
    %646 = vmatprep.subr.mxu0 0.0
    %647 = vmatpush1.xpose.msra.mxu0 0.0
    %648 = vmatprep.subr.mxu0 0.0
    %649 = vmatpush1.xpose.msra.mxu0 0.0
    %650 = vmatprep.subr.mxu0 0.0
    %651 = vmatpush1.xpose.msra.mxu0 0.0
    %652 = vmatprep.subr.mxu0 0.0
    %653 = vmatpush1.xpose.msra.mxu0 0.0
    %654 = vmatprep.subr.mxu0 0.0
    %655 = vmatpush1.xpose.msra.mxu0 0.0
    %656 = vmatprep.subr.mxu0 0.0
    %657 = vmatpush1.xpose.msra.mxu0 0.0
    %658 = vmatprep.subr.mxu0 0.0
    %659 = vmatpush1.xpose.msra.mxu0 0.0
    %660 = vmatprep.subr.mxu0 0.0
    %661 = vmatpush1.xpose.msra.mxu0 0.0
    %662 = vmatprep.subr.mxu0 0.0
    %663 = vmatpush1.xpose.msra.mxu0 0.0
    %664 = vmatprep.subr.mxu0 0.0
    %665 = vmatpush1.xpose.msra.mxu0 0.0
    %666 = vmatprep.subr.mxu0 0.0
    %667 = vmatpush1.xpose.msra.mxu0 0.0
    %668 = vmatprep.subr.mxu0 0.0
    %669 = vmatpush1.xpose.msra.mxu0 0.0
    %670 = vmatprep.subr.mxu0 0.0
    %671 = vmatpush1.xpose.msra.mxu0 0.0
    %672 = vmatprep.subr.mxu0 0.0
    %673 = vmatpush1.xpose.msra.mxu0 0.0
    %674 = vmatprep.subr.mxu0 0.0
    %675 = vmatpush1.xpose.msra.mxu0 0.0
    %676 = vmatprep.subr.mxu0 0.0
    %677 = vmatpush1.xpose.msra.mxu0 0.0
    %678 = vmatprep.subr.mxu0 0.0
    %679 = vmatpush1.xpose.msra.mxu0 0.0
    %680 = vmatprep.mubr.f32.mxu0 0.0
    %681 = vmatmul.mubr.f32.gmra.mrb[0].mxu0 %v606
    %v682 = vpop.f32.mrb[0].mxu0
    %v683 = vadd.f32 0.0, %v682
    %v684 = vpop.f32.mrb[0].mxu0
    %685 = vmatprep.mubr.f32.mxu0 0.0
    %686 = vmatmul.mubr.f32.gmra.mrb[0].mxu0 %v608
    %v687 = vpop.f32.mrb[0].mxu0
    %v688 = vadd.f32 0.0, %v687
    %v689 = vpop.f32.mrb[0].mxu0
    %690 = vdwg.mxu0
    %v691 = vmul.f32 %v683, 0.25
    %v692 = vmul.f32 %v688, 0.25
    %v693 = vsel %vm481, %v691, -inf
    %694 = vmax.xlane.f32.xlu0 %v693
    %v695 = vpop.xlane.xlu0 %694
    %v696 = vsel %vm481, %v692, -inf
    %697 = vmax.xlane.f32.xlu0 %v696
    %v698 = vpop.xlane.xlu0 %697
    %v699 = vsub.f32 %v691, %v695
    %v700 = vsub.f32 %v692, %v698
    %v701 = vmul.f32 %v699, 1.442695
    %v702 = vpow.pop %v701
    %v703 = vmul.f32 %v700, 1.442695
    %v704 = vpow.pop %v703
    %v705 = vsel %vm481, %v702, 0.0
    %706 = vadd.xlane.f32.xlu0 %v705
    %v707 = vpop.xlane.xlu0 %706
    %v708 = vsel %vm481, %v704, 0.0
    %709 = vadd.xlane.f32.xlu0 %v708
    %v710 = vpop.xlane.xlu0 %709
    %v711 = vrcp.pop %v707
    %v712 = vrcp.pop %v710
    %v713 = vmul.f32 %v702, %v711
    %v714 = vmul.f32 %v704, %v712
    %715 = vrot.lane.b32.xlu0 %v357, 48
    %v716 = vpop.permute.xlu0 %715
    %717 = vrot.lane.b32.xlu0 %v362, 48
    %v718 = vpop.permute.xlu0 %717
    %719 = vrot.lane.b32.xlu0 %v367, 48
    %v720 = vpop.permute.xlu0 %719
    %v725 = vsel %vm481, %v713, 0
    %v728 = vsel %vm481, %v714, 0
    %730 = vmatprep.subr.mxu0 0.0
    %731 = vmatpush1.msra.mxu0 %v716
    %732 = vmatprep.subr.mxu0 0.0
    %733 = vmatpush1.msra.mxu0 %v718
    %734 = vmatprep.subr.mxu0 0.0
    %735 = vmatpush1.msra.mxu0 %v720
    %736 = vmatprep.subr.mxu0 0.0
    %737 = vmatpush1.msra.mxu0 0.0
    %738 = vmatprep.subr.mxu0 0.0
    %739 = vmatpush1.msra.mxu0 0.0
    %740 = vmatprep.subr.mxu0 0.0
    %741 = vmatpush1.msra.mxu0 0.0
    %742 = vmatprep.subr.mxu0 0.0
    %743 = vmatpush1.msra.mxu0 0.0
    %744 = vmatprep.subr.mxu0 0.0
    %745 = vmatpush1.msra.mxu0 0.0
    %746 = vmatprep.subr.mxu0 0.0
    %747 = vmatpush1.msra.mxu0 0.0
    %748 = vmatprep.subr.mxu0 0.0
    %749 = vmatpush1.msra.mxu0 0.0
    %750 = vmatprep.subr.mxu0 0.0
    %751 = vmatpush1.msra.mxu0 0.0
    %752 = vmatprep.subr.mxu0 0.0
    %753 = vmatpush1.msra.mxu0 0.0
    %754 = vmatprep.subr.mxu0 0.0
    %755 = vmatpush1.msra.mxu0 0.0
    %756 = vmatprep.subr.mxu0 0.0
    %757 = vmatpush1.msra.mxu0 0.0
    %758 = vmatprep.subr.mxu0 0.0
    %759 = vmatpush1.msra.mxu0 0.0
    %760 = vmatprep.subr.mxu0 0.0
    %761 = vmatpush1.msra.mxu0 0.0
    %762 = vmatprep.subr.mxu0 0.0
    %763 = vmatpush1.msra.mxu0 0.0
    %764 = vmatprep.subr.mxu0 0.0
    %765 = vmatpush1.msra.mxu0 0.0
    %766 = vmatprep.subr.mxu0 0.0
    %767 = vmatpush1.msra.mxu0 0.0
    %768 = vmatprep.subr.mxu0 0.0
    %769 = vmatpush1.msra.mxu0 0.0
    %770 = vmatprep.subr.mxu0 0.0
    %771 = vmatpush1.msra.mxu0 0.0
    %772 = vmatprep.subr.mxu0 0.0
    %773 = vmatpush1.msra.mxu0 0.0
    %774 = vmatprep.subr.mxu0 0.0
    %775 = vmatpush1.msra.mxu0 0.0
    %776 = vmatprep.subr.mxu0 0.0
    %777 = vmatpush1.msra.mxu0 0.0
    %778 = vmatprep.subr.mxu0 0.0
    %779 = vmatpush1.msra.mxu0 0.0
    %780 = vmatprep.subr.mxu0 0.0
    %781 = vmatpush1.msra.mxu0 0.0
    %782 = vmatprep.subr.mxu0 0.0
    %783 = vmatpush1.msra.mxu0 0.0
    %784 = vmatprep.subr.mxu0 0.0
    %785 = vmatpush1.msra.mxu0 0.0
    %786 = vmatprep.subr.mxu0 0.0
    %787 = vmatpush1.msra.mxu0 0.0
    %788 = vmatprep.subr.mxu0 0.0
    %789 = vmatpush1.msra.mxu0 0.0
    %790 = vmatprep.subr.mxu0 0.0
    %791 = vmatpush1.msra.mxu0 0.0
    %792 = vmatprep.subr.mxu0 0.0
    %793 = vmatpush1.msra.mxu0 0.0
    %794 = vmatprep.mubr.f32.mxu0 0.0
    %795 = vmatmul.mubr.f32.gmra.mrb[0].mxu0 %v725
    %v796 = vpop.f32.mrb[0].mxu0
    %v797 = vadd.f32 0.0, %v796
    %v798 = vpop.f32.mrb[0].mxu0
    %799 = vmatprep.mubr.f32.mxu0 0.0
    %800 = vmatmul.mubr.f32.gmra.mrb[0].mxu0 %v728
    %v801 = vpop.f32.mrb[0].mxu0
    %v802 = vadd.f32 0.0, %v801
    %v803 = vpop.f32.mrb[0].mxu0
    %804 = vdwg.mxu0
    %v805 = vld [vmem:[%s7 + $0x10] sm:$0xff]
    %v806 = vld [vmem:[%s7 + $0x18] sm:$0xff]
    %v808 = vsel %vm99, %v797, 0
    %v811 = vsel %vm99, %v802, 0
    %813 = vmatprep.subr.mxu0 0.0
    %814 = vmatpush1.msra.mxu0 %v805
    %815 = vmatprep.subr.mxu0 0.0
    %816 = vmatpush1.msra.mxu0 %v806
    %817 = vmatprep.subr.mxu0 0.0
    %818 = vmatpush1.msra.mxu0 0.0
    %819 = vmatprep.subr.mxu0 0.0
    %820 = vmatpush1.msra.mxu0 0.0
    %821 = vmatprep.subr.mxu0 0.0
    %822 = vmatpush1.msra.mxu0 0.0
    %823 = vmatprep.subr.mxu0 0.0
    %824 = vmatpush1.msra.mxu0 0.0
    %825 = vmatprep.subr.mxu0 0.0
    %826 = vmatpush1.msra.mxu0 0.0
    %827 = vmatprep.subr.mxu0 0.0
    %828 = vmatpush1.msra.mxu0 0.0
    %829 = vmatprep.subr.mxu0 0.0
    %830 = vmatpush1.msra.mxu0 0.0
    %831 = vmatprep.subr.mxu0 0.0
    %832 = vmatpush1.msra.mxu0 0.0
    %833 = vmatprep.subr.mxu0 0.0
    %834 = vmatpush1.msra.mxu0 0.0
    %835 = vmatprep.subr.mxu0 0.0
    %836 = vmatpush1.msra.mxu0 0.0
    %837 = vmatprep.subr.mxu0 0.0
    %838 = vmatpush1.msra.mxu0 0.0
    %839 = vmatprep.subr.mxu0 0.0
    %840 = vmatpush1.msra.mxu0 0.0
    %841 = vmatprep.subr.mxu0 0.0
    %842 = vmatpush1.msra.mxu0 0.0
    %843 = vmatprep.subr.mxu0 0.0
    %844 = vmatpush1.msra.mxu0 0.0
    %845 = vmatprep.subr.mxu0 0.0
    %846 = vmatpush1.msra.mxu0 0.0
    %847 = vmatprep.subr.mxu0 0.0
    %848 = vmatpush1.msra.mxu0 0.0
    %849 = vmatprep.subr.mxu0 0.0
    %850 = vmatpush1.msra.mxu0 0.0
    %851 = vmatprep.subr.mxu0 0.0
    %852 = vmatpush1.msra.mxu0 0.0
    %853 = vmatprep.subr.mxu0 0.0
    %854 = vmatpush1.msra.mxu0 0.0
    %855 = vmatprep.subr.mxu0 0.0
    %856 = vmatpush1.msra.mxu0 0.0
    %857 = vmatprep.subr.mxu0 0.0
    %858 = vmatpush1.msra.mxu0 0.0
    %859 = vmatprep.subr.mxu0 0.0
    %860 = vmatpush1.msra.mxu0 0.0
    %861 = vmatprep.subr.mxu0 0.0
    %862 = vmatpush1.msra.mxu0 0.0
    %863 = vmatprep.subr.mxu0 0.0
    %864 = vmatpush1.msra.mxu0 0.0
    %865 = vmatprep.subr.mxu0 0.0
    %866 = vmatpush1.msra.mxu0 0.0
    %867 = vmatprep.subr.mxu0 0.0
    %868 = vmatpush1.msra.mxu0 0.0
    %869 = vmatprep.subr.mxu0 0.0
    %870 = vmatpush1.msra.mxu0 0.0
    %871 = vmatprep.subr.mxu0 0.0
    %872 = vmatpush1.msra.mxu0 0.0
    %873 = vmatprep.subr.mxu0 0.0
    %874 = vmatpush1.msra.mxu0 0.0
    %875 = vmatprep.subr.mxu0 0.0
    %876 = vmatpush1.msra.mxu0 0.0
    %877 = vmatprep.mubr.f32.mxu0 0.0
    %878 = vmatmul.mubr.f32.gmra.mrb[0].mxu0 %v808
    %v879 = vpop.f32.mrb[0].mxu0
    %v880 = vadd.f32 0.0, %v879
    %v881 = vpop.f32.mrb[0].mxu0
    %882 = vmatprep.mubr.f32.mxu0 0.0
    %883 = vmatmul.mubr.f32.gmra.mrb[0].mxu0 %v811
    %v884 = vpop.f32.mrb[0].mxu0
    %v885 = vadd.f32 0.0, %v884
    %v886 = vpop.f32.mrb[0].mxu0
    %887 = vdwg.mxu0
    %v889 = vsel %vm99, %v586, 0
    %v892 = vsel %vm99, %v591, 0
    %894 = vmatprep.subr.mxu0 0.0
    %895 = vmatpush1.msra.mxu0 %v594
    %896 = vmatprep.subr.mxu0 0.0
    %897 = vmatpush1.msra.mxu0 %v595
    %898 = vmatprep.subr.mxu0 0.0
    %899 = vmatpush1.msra.mxu0 0.0
    %900 = vmatprep.subr.mxu0 0.0
    %901 = vmatpush1.msra.mxu0 0.0
    %902 = vmatprep.subr.mxu0 0.0
    %903 = vmatpush1.msra.mxu0 0.0
    %904 = vmatprep.subr.mxu0 0.0
    %905 = vmatpush1.msra.mxu0 0.0
    %906 = vmatprep.subr.mxu0 0.0
    %907 = vmatpush1.msra.mxu0 0.0
    %908 = vmatprep.subr.mxu0 0.0
    %909 = vmatpush1.msra.mxu0 0.0
    %910 = vmatprep.subr.mxu0 0.0
    %911 = vmatpush1.msra.mxu0 0.0
    %912 = vmatprep.subr.mxu0 0.0
    %913 = vmatpush1.msra.mxu0 0.0
    %914 = vmatprep.subr.mxu0 0.0
    %915 = vmatpush1.msra.mxu0 0.0
    %916 = vmatprep.subr.mxu0 0.0
    %917 = vmatpush1.msra.mxu0 0.0
    %918 = vmatprep.subr.mxu0 0.0
    %919 = vmatpush1.msra.mxu0 0.0
    %920 = vmatprep.subr.mxu0 0.0
    %921 = vmatpush1.msra.mxu0 0.0
    %922 = vmatprep.subr.mxu0 0.0
    %923 = vmatpush1.msra.mxu0 0.0
    %924 = vmatprep.subr.mxu0 0.0
    %925 = vmatpush1.msra.mxu0 0.0
    %926 = vmatprep.subr.mxu0 0.0
    %927 = vmatpush1.msra.mxu0 0.0
    %928 = vmatprep.subr.mxu0 0.0
    %929 = vmatpush1.msra.mxu0 0.0
    %930 = vmatprep.subr.mxu0 0.0
    %931 = vmatpush1.msra.mxu0 0.0
    %932 = vmatprep.subr.mxu0 0.0
    %933 = vmatpush1.msra.mxu0 0.0
    %934 = vmatprep.subr.mxu0 0.0
    %935 = vmatpush1.msra.mxu0 0.0
    %936 = vmatprep.subr.mxu0 0.0
    %937 = vmatpush1.msra.mxu0 0.0
    %938 = vmatprep.subr.mxu0 0.0
    %939 = vmatpush1.msra.mxu0 0.0
    %940 = vmatprep.subr.mxu0 0.0
    %941 = vmatpush1.msra.mxu0 0.0
    %942 = vmatprep.subr.mxu0 0.0
    %943 = vmatpush1.msra.mxu0 0.0
    %944 = vmatprep.subr.mxu0 0.0
    %945 = vmatpush1.msra.mxu0 0.0
    %946 = vmatprep.subr.mxu0 0.0
    %947 = vmatpush1.msra.mxu0 0.0
    %948 = vmatprep.subr.mxu0 0.0
    %949 = vmatpush1.msra.mxu0 0.0
    %950 = vmatprep.subr.mxu0 0.0
    %951 = vmatpush1.msra.mxu0 0.0
    %952 = vmatprep.subr.mxu0 0.0
    %953 = vmatpush1.msra.mxu0 0.0
    %954 = vmatprep.subr.mxu0 0.0
    %955 = vmatpush1.msra.mxu0 0.0
    %956 = vmatprep.subr.mxu0 0.0
    %957 = vmatpush1.msra.mxu0 0.0
    %958 = vmatprep.mubr.f32.mxu0 0.0
    %959 = vmatmul.mubr.f32.gmra.mrb[0].mxu0 %v889
    %v960 = vpop.f32.mrb[0].mxu0
    %v961 = vadd.f32 %v880, %v960
    %v962 = vpop.f32.mrb[0].mxu0
    %963 = vmatprep.mubr.f32.mxu0 0.0
    %964 = vmatmul.mubr.f32.gmra.mrb[0].mxu0 %v892
    %v965 = vpop.f32.mrb[0].mxu0
    %v966 = vadd.f32 %v885, %v965
    %v967 = vpop.f32.mrb[0].mxu0
    %968 = vdwg.mxu0
    %972 = vrot.lane.b32.xlu0 %v372, 96
    %v973 = vpop.permute.xlu0 %972
    %974 = vrot.lane.b32.xlu0 %v377, 96
    %v975 = vpop.permute.xlu0 %974
    %976 = vrot.lane.b32.xlu0 %v382, 96
    %v977 = vpop.permute.xlu0 %976
    %v978 = vsel %vm99, %v372, 0
    %v980 = vsel %vm99, %v377, 0
    %v982 = vsel %vm99, %v973, 0
    %v984 = vsel %vm99, %v975, 0
    %v986 = vsel %vm99, %v977, 0
    %988 = vmatprep.subr.mxu0 0.0
    %989 = vmatpush1.xpose.msra.mxu0 %v982
    %990 = vmatprep.subr.mxu0 0.0
    %991 = vmatpush1.xpose.msra.mxu0 %v984
    %992 = vmatprep.subr.mxu0 0.0
    %993 = vmatpush1.xpose.msra.mxu0 %v986
    %994 = vmatprep.subr.mxu0 0.0
    %995 = vmatpush1.xpose.msra.mxu0 0.0
    %996 = vmatprep.subr.mxu0 0.0
    %997 = vmatpush1.xpose.msra.mxu0 0.0
    %998 = vmatprep.subr.mxu0 0.0
    %999 = vmatpush1.xpose.msra.mxu0 0.0
    %1000 = vmatprep.subr.mxu0 0.0
    %1001 = vmatpush1.xpose.msra.mxu0 0.0
    %1002 = vmatprep.subr.mxu0 0.0
    %1003 = vmatpush1.xpose.msra.mxu0 0.0
    %1004 = vmatprep.subr.mxu0 0.0
    %1005 = vmatpush1.xpose.msra.mxu0 0.0
    %1006 = vmatprep.subr.mxu0 0.0
    %1007 = vmatpush1.xpose.msra.mxu0 0.0
    %1008 = vmatprep.subr.mxu0 0.0
    %1009 = vmatpush1.xpose.msra.mxu0 0.0
    %1010 = vmatprep.subr.mxu0 0.0
    %1011 = vmatpush1.xpose.msra.mxu0 0.0
    %1012 = vmatprep.subr.mxu0 0.0
    %1013 = vmatpush1.xpose.msra.mxu0 0.0
    %1014 = vmatprep.subr.mxu0 0.0
    %1015 = vmatpush1.xpose.msra.mxu0 0.0
    %1016 = vmatprep.subr.mxu0 0.0
    %1017 = vmatpush1.xpose.msra.mxu0 0.0
    %1018 = vmatprep.subr.mxu0 0.0
    %1019 = vmatpush1.xpose.msra.mxu0 0.0
    %1020 = vmatprep.subr.mxu0 0.0
    %1021 = vmatpush1.xpose.msra.mxu0 0.0
    %1022 = vmatprep.subr.mxu0 0.0
    %1023 = vmatpush1.xpose.msra.mxu0 0.0
    %1024 = vmatprep.subr.mxu0 0.0
    %1025 = vmatpush1.xpose.msra.mxu0 0.0
    %1026 = vmatprep.subr.mxu0 0.0
    %1027 = vmatpush1.xpose.msra.mxu0 0.0
    %1028 = vmatprep.subr.mxu0 0.0
    %1029 = vmatpush1.xpose.msra.mxu0 0.0
    %1030 = vmatprep.subr.mxu0 0.0
    %1031 = vmatpush1.xpose.msra.mxu0 0.0
    %1032 = vmatprep.subr.mxu0 0.0
    %1033 = vmatpush1.xpose.msra.mxu0 0.0
    %1034 = vmatprep.subr.mxu0 0.0
    %1035 = vmatpush1.xpose.msra.mxu0 0.0
    %1036 = vmatprep.subr.mxu0 0.0
    %1037 = vmatpush1.xpose.msra.mxu0 0.0
    %1038 = vmatprep.subr.mxu0 0.0
    %1039 = vmatpush1.xpose.msra.mxu0 0.0
    %1040 = vmatprep.subr.mxu0 0.0
    %1041 = vmatpush1.xpose.msra.mxu0 0.0
    %1042 = vmatprep.subr.mxu0 0.0
    %1043 = vmatpush1.xpose.msra.mxu0 0.0
    %1044 = vmatprep.subr.mxu0 0.0
    %1045 = vmatpush1.xpose.msra.mxu0 0.0
    %1046 = vmatprep.subr.mxu0 0.0
    %1047 = vmatpush1.xpose.msra.mxu0 0.0
    %1048 = vmatprep.subr.mxu0 0.0
    %1049 = vmatpush1.xpose.msra.mxu0 0.0
    %1050 = vmatprep.subr.mxu0 0.0
    %1051 = vmatpush1.xpose.msra.mxu0 0.0
    %1052 = vmatprep.mubr.f32.mxu0 0.0
    %1053 = vmatmul.mubr.f32.gmra.mrb[0].mxu0 %v978
    %v1054 = vpop.f32.mrb[0].mxu0
    %v1055 = vadd.f32 0.0, %v1054
    %v1056 = vpop.f32.mrb[0].mxu0
    %1057 = vmatprep.mubr.f32.mxu0 0.0
    %1058 = vmatmul.mubr.f32.gmra.mrb[0].mxu0 %v980
    %v1059 = vpop.f32.mrb[0].mxu0
    %v1060 = vadd.f32 0.0, %v1059
    %v1061 = vpop.f32.mrb[0].mxu0
    %1062 = vdwg.mxu0
    %v1063 = vmul.f32 %v1055, 0.25
    %v1064 = vmul.f32 %v1060, 0.25
    %v1065 = vsel %vm481, %v1063, -inf
    %1066 = vmax.xlane.f32.xlu0 %v1065
    %v1067 = vpop.xlane.xlu0 %1066
    %v1068 = vsel %vm481, %v1064, -inf
    %1069 = vmax.xlane.f32.xlu0 %v1068
    %v1070 = vpop.xlane.xlu0 %1069
    %v1071 = vsub.f32 %v1063, %v1067
    %v1072 = vsub.f32 %v1064, %v1070
    %v1073 = vmul.f32 %v1071, 1.442695
    %v1074 = vpow.pop %v1073
    %v1075 = vmul.f32 %v1072, 1.442695
    %v1076 = vpow.pop %v1075
    %v1077 = vsel %vm481, %v1074, 0.0
    %1078 = vadd.xlane.f32.xlu0 %v1077
    %v1079 = vpop.xlane.xlu0 %1078
    %v1080 = vsel %vm481, %v1076, 0.0
    %1081 = vadd.xlane.f32.xlu0 %v1080
    %v1082 = vpop.xlane.xlu0 %1081
    %v1083 = vrcp.pop %v1079
    %v1084 = vrcp.pop %v1082
    %v1085 = vmul.f32 %v1074, %v1083
    %v1086 = vmul.f32 %v1076, %v1084
    %1087 = vrot.lane.b32.xlu0 %v372, 64
    %v1088 = vpop.permute.xlu0 %1087
    %1089 = vrot.lane.b32.xlu0 %v377, 64
    %v1090 = vpop.permute.xlu0 %1089
    %1091 = vrot.lane.b32.xlu0 %v382, 64
    %v1092 = vpop.permute.xlu0 %1091
    %v1097 = vsel %vm481, %v1085, 0
    %v1100 = vsel %vm481, %v1086, 0
    %1102 = vmatprep.subr.mxu0 0.0
    %1103 = vmatpush1.msra.mxu0 %v1088
    %1104 = vmatprep.subr.mxu0 0.0
    %1105 = vmatpush1.msra.mxu0 %v1090
    %1106 = vmatprep.subr.mxu0 0.0
    %1107 = vmatpush1.msra.mxu0 %v1092
    %1108 = vmatprep.subr.mxu0 0.0
    %1109 = vmatpush1.msra.mxu0 0.0
    %1110 = vmatprep.subr.mxu0 0.0
    %1111 = vmatpush1.msra.mxu0 0.0
    %1112 = vmatprep.subr.mxu0 0.0
    %1113 = vmatpush1.msra.mxu0 0.0
    %1114 = vmatprep.subr.mxu0 0.0
    %1115 = vmatpush1.msra.mxu0 0.0
    %1116 = vmatprep.subr.mxu0 0.0
    %1117 = vmatpush1.msra.mxu0 0.0
    %1118 = vmatprep.subr.mxu0 0.0
    %1119 = vmatpush1.msra.mxu0 0.0
    %1120 = vmatprep.subr.mxu0 0.0
    %1121 = vmatpush1.msra.mxu0 0.0
    %1122 = vmatprep.subr.mxu0 0.0
    %1123 = vmatpush1.msra.mxu0 0.0
    %1124 = vmatprep.subr.mxu0 0.0
    %1125 = vmatpush1.msra.mxu0 0.0
    %1126 = vmatprep.subr.mxu0 0.0
    %1127 = vmatpush1.msra.mxu0 0.0
    %1128 = vmatprep.subr.mxu0 0.0
    %1129 = vmatpush1.msra.mxu0 0.0
    %1130 = vmatprep.subr.mxu0 0.0
    %1131 = vmatpush1.msra.mxu0 0.0
    %1132 = vmatprep.subr.mxu0 0.0
    %1133 = vmatpush1.msra.mxu0 0.0
    %1134 = vmatprep.subr.mxu0 0.0
    %1135 = vmatpush1.msra.mxu0 0.0
    %1136 = vmatprep.subr.mxu0 0.0
    %1137 = vmatpush1.msra.mxu0 0.0
    %1138 = vmatprep.subr.mxu0 0.0
    %1139 = vmatpush1.msra.mxu0 0.0
    %1140 = vmatprep.subr.mxu0 0.0
    %1141 = vmatpush1.msra.mxu0 0.0
    %1142 = vmatprep.subr.mxu0 0.0
    %1143 = vmatpush1.msra.mxu0 0.0
    %1144 = vmatprep.subr.mxu0 0.0
    %1145 = vmatpush1.msra.mxu0 0.0
    %1146 = vmatprep.subr.mxu0 0.0
    %1147 = vmatpush1.msra.mxu0 0.0
    %1148 = vmatprep.subr.mxu0 0.0
    %1149 = vmatpush1.msra.mxu0 0.0
    %1150 = vmatprep.subr.mxu0 0.0
    %1151 = vmatpush1.msra.mxu0 0.0
    %1152 = vmatprep.subr.mxu0 0.0
    %1153 = vmatpush1.msra.mxu0 0.0
    %1154 = vmatprep.subr.mxu0 0.0
    %1155 = vmatpush1.msra.mxu0 0.0
    %1156 = vmatprep.subr.mxu0 0.0
    %1157 = vmatpush1.msra.mxu0 0.0
    %1158 = vmatprep.subr.mxu0 0.0
    %1159 = vmatpush1.msra.mxu0 0.0
    %1160 = vmatprep.subr.mxu0 0.0
    %1161 = vmatpush1.msra.mxu0 0.0
    %1162 = vmatprep.subr.mxu0 0.0
    %1163 = vmatpush1.msra.mxu0 0.0
    %1164 = vmatprep.subr.mxu0 0.0
    %1165 = vmatpush1.msra.mxu0 0.0
    %1166 = vmatprep.mubr.f32.mxu0 0.0
    %1167 = vmatmul.mubr.f32.gmra.mrb[0].mxu0 %v1097
    %v1168 = vpop.f32.mrb[0].mxu0
    %v1169 = vadd.f32 0.0, %v1168
    %v1170 = vpop.f32.mrb[0].mxu0
    %1171 = vmatprep.mubr.f32.mxu0 0.0
    %1172 = vmatmul.mubr.f32.gmra.mrb[0].mxu0 %v1100
    %v1173 = vpop.f32.mrb[0].mxu0
    %v1174 = vadd.f32 0.0, %v1173
    %v1175 = vpop.f32.mrb[0].mxu0
    %1176 = vdwg.mxu0
    %1177 = vrot.lane.b32.xlu0 %v372, 112
    %v1178 = vpop.permute.xlu0 %1177
    %1179 = vrot.lane.b32.xlu0 %v377, 112
    %v1180 = vpop.permute.xlu0 %1179
    %1181 = vrot.lane.b32.xlu0 %v372, 80
    %v1182 = vpop.permute.xlu0 %1181
    %1183 = vrot.lane.b32.xlu0 %v377, 80
    %v1184 = vpop.permute.xlu0 %1183
    %1185 = vrot.lane.b32.xlu0 %v382, 80
    %v1186 = vpop.permute.xlu0 %1185
    %v1187 = vsel %vm99, %v1178, 0
    %v1189 = vsel %vm99, %v1180, 0
    %v1191 = vsel %vm99, %v1182, 0
    %v1193 = vsel %vm99, %v1184, 0
    %v1195 = vsel %vm99, %v1186, 0
    %1197 = vmatprep.subr.mxu0 0.0
    %1198 = vmatpush1.xpose.msra.mxu0 %v1191
    %1199 = vmatprep.subr.mxu0 0.0
    %1200 = vmatpush1.xpose.msra.mxu0 %v1193
    %1201 = vmatprep.subr.mxu0 0.0
    %1202 = vmatpush1.xpose.msra.mxu0 %v1195
    %1203 = vmatprep.subr.mxu0 0.0
    %1204 = vmatpush1.xpose.msra.mxu0 0.0
    %1205 = vmatprep.subr.mxu0 0.0
    %1206 = vmatpush1.xpose.msra.mxu0 0.0
    %1207 = vmatprep.subr.mxu0 0.0
    %1208 = vmatpush1.xpose.msra.mxu0 0.0
    %1209 = vmatprep.subr.mxu0 0.0
    %1210 = vmatpush1.xpose.msra.mxu0 0.0
    %1211 = vmatprep.subr.mxu0 0.0
    %1212 = vmatpush1.xpose.msra.mxu0 0.0
    %1213 = vmatprep.subr.mxu0 0.0
    %1214 = vmatpush1.xpose.msra.mxu0 0.0
    %1215 = vmatprep.subr.mxu0 0.0
    %1216 = vmatpush1.xpose.msra.mxu0 0.0
    %1217 = vmatprep.subr.mxu0 0.0
    %1218 = vmatpush1.xpose.msra.mxu0 0.0
    %1219 = vmatprep.subr.mxu0 0.0
    %1220 = vmatpush1.xpose.msra.mxu0 0.0
    %1221 = vmatprep.subr.mxu0 0.0
    %1222 = vmatpush1.xpose.msra.mxu0 0.0
    %1223 = vmatprep.subr.mxu0 0.0
    %1224 = vmatpush1.xpose.msra.mxu0 0.0
    %1225 = vmatprep.subr.mxu0 0.0
    %1226 = vmatpush1.xpose.msra.mxu0 0.0
    %1227 = vmatprep.subr.mxu0 0.0
    %1228 = vmatpush1.xpose.msra.mxu0 0.0
    %1229 = vmatprep.subr.mxu0 0.0
    %1230 = vmatpush1.xpose.msra.mxu0 0.0
    %1231 = vmatprep.subr.mxu0 0.0
    %1232 = vmatpush1.xpose.msra.mxu0 0.0
    %1233 = vmatprep.subr.mxu0 0.0
    %1234 = vmatpush1.xpose.msra.mxu0 0.0
    %1235 = vmatprep.subr.mxu0 0.0
    %1236 = vmatpush1.xpose.msra.mxu0 0.0
    %1237 = vmatprep.subr.mxu0 0.0
    %1238 = vmatpush1.xpose.msra.mxu0 0.0
    %1239 = vmatprep.subr.mxu0 0.0
    %1240 = vmatpush1.xpose.msra.mxu0 0.0
    %1241 = vmatprep.subr.mxu0 0.0
    %1242 = vmatpush1.xpose.msra.mxu0 0.0
    %1243 = vmatprep.subr.mxu0 0.0
    %1244 = vmatpush1.xpose.msra.mxu0 0.0
    %1245 = vmatprep.subr.mxu0 0.0
    %1246 = vmatpush1.xpose.msra.mxu0 0.0
    %1247 = vmatprep.subr.mxu0 0.0
    %1248 = vmatpush1.xpose.msra.mxu0 0.0
    %1249 = vmatprep.subr.mxu0 0.0
    %1250 = vmatpush1.xpose.msra.mxu0 0.0
    %1251 = vmatprep.subr.mxu0 0.0
    %1252 = vmatpush1.xpose.msra.mxu0 0.0
    %1253 = vmatprep.subr.mxu0 0.0
    %1254 = vmatpush1.xpose.msra.mxu0 0.0
    %1255 = vmatprep.subr.mxu0 0.0
    %1256 = vmatpush1.xpose.msra.mxu0 0.0
    %1257 = vmatprep.subr.mxu0 0.0
    %1258 = vmatpush1.xpose.msra.mxu0 0.0
    %1259 = vmatprep.subr.mxu0 0.0
    %1260 = vmatpush1.xpose.msra.mxu0 0.0
    %1261 = vmatprep.mubr.f32.mxu0 0.0
    %1262 = vmatmul.mubr.f32.gmra.mrb[0].mxu0 %v1187
    %v1263 = vpop.f32.mrb[0].mxu0
    %v1264 = vadd.f32 0.0, %v1263
    %v1265 = vpop.f32.mrb[0].mxu0
    %1266 = vmatprep.mubr.f32.mxu0 0.0
    %1267 = vmatmul.mubr.f32.gmra.mrb[0].mxu0 %v1189
    %v1268 = vpop.f32.mrb[0].mxu0
    %v1269 = vadd.f32 0.0, %v1268
    %v1270 = vpop.f32.mrb[0].mxu0
    %1271 = vdwg.mxu0
    %v1272 = vmul.f32 %v1264, 0.25
    %v1273 = vmul.f32 %v1269, 0.25
    %v1274 = vsel %vm481, %v1272, -inf
    %1275 = vmax.xlane.f32.xlu0 %v1274
    %v1276 = vpop.xlane.xlu0 %1275
    %v1277 = vsel %vm481, %v1273, -inf
    %1278 = vmax.xlane.f32.xlu0 %v1277
    %v1279 = vpop.xlane.xlu0 %1278
    %v1280 = vsub.f32 %v1272, %v1276
    %v1281 = vsub.f32 %v1273, %v1279
    %v1282 = vmul.f32 %v1280, 1.442695
    %v1283 = vpow.pop %v1282
    %v1284 = vmul.f32 %v1281, 1.442695
    %v1285 = vpow.pop %v1284
    %v1286 = vsel %vm481, %v1283, 0.0
    %1287 = vadd.xlane.f32.xlu0 %v1286
    %v1288 = vpop.xlane.xlu0 %1287
    %v1289 = vsel %vm481, %v1285, 0.0
    %1290 = vadd.xlane.f32.xlu0 %v1289
    %v1291 = vpop.xlane.xlu0 %1290
    %v1292 = vrcp.pop %v1288
    %v1293 = vrcp.pop %v1291
    %v1294 = vmul.f32 %v1283, %v1292
    %v1295 = vmul.f32 %v1285, %v1293
    %1296 = vrot.lane.b32.xlu0 %v372, 48
    %v1297 = vpop.permute.xlu0 %1296
    %1298 = vrot.lane.b32.xlu0 %v377, 48
    %v1299 = vpop.permute.xlu0 %1298
    %1300 = vrot.lane.b32.xlu0 %v382, 48
    %v1301 = vpop.permute.xlu0 %1300
    %v1306 = vsel %vm481, %v1294, 0
    %v1309 = vsel %vm481, %v1295, 0
    %1311 = vmatprep.subr.mxu0 0.0
    %1312 = vmatpush1.msra.mxu0 %v1297
    %1313 = vmatprep.subr.mxu0 0.0
    %1314 = vmatpush1.msra.mxu0 %v1299
    %1315 = vmatprep.subr.mxu0 0.0
    %1316 = vmatpush1.msra.mxu0 %v1301
    %1317 = vmatprep.subr.mxu0 0.0
    %1318 = vmatpush1.msra.mxu0 0.0
    %1319 = vmatprep.subr.mxu0 0.0
    %1320 = vmatpush1.msra.mxu0 0.0
    %1321 = vmatprep.subr.mxu0 0.0
    %1322 = vmatpush1.msra.mxu0 0.0
    %1323 = vmatprep.subr.mxu0 0.0
    %1324 = vmatpush1.msra.mxu0 0.0
    %1325 = vmatprep.subr.mxu0 0.0
    %1326 = vmatpush1.msra.mxu0 0.0
    %1327 = vmatprep.subr.mxu0 0.0
    %1328 = vmatpush1.msra.mxu0 0.0
    %1329 = vmatprep.subr.mxu0 0.0
    %1330 = vmatpush1.msra.mxu0 0.0
    %1331 = vmatprep.subr.mxu0 0.0
    %1332 = vmatpush1.msra.mxu0 0.0
    %1333 = vmatprep.subr.mxu0 0.0
    %1334 = vmatpush1.msra.mxu0 0.0
    %1335 = vmatprep.subr.mxu0 0.0
    %1336 = vmatpush1.msra.mxu0 0.0
    %1337 = vmatprep.subr.mxu0 0.0
    %1338 = vmatpush1.msra.mxu0 0.0
    %1339 = vmatprep.subr.mxu0 0.0
    %1340 = vmatpush1.msra.mxu0 0.0
    %1341 = vmatprep.subr.mxu0 0.0
    %1342 = vmatpush1.msra.mxu0 0.0
    %1343 = vmatprep.subr.mxu0 0.0
    %1344 = vmatpush1.msra.mxu0 0.0
    %1345 = vmatprep.subr.mxu0 0.0
    %1346 = vmatpush1.msra.mxu0 0.0
    %1347 = vmatprep.subr.mxu0 0.0
    %1348 = vmatpush1.msra.mxu0 0.0
    %1349 = vmatprep.subr.mxu0 0.0
    %1350 = vmatpush1.msra.mxu0 0.0
    %1351 = vmatprep.subr.mxu0 0.0
    %1352 = vmatpush1.msra.mxu0 0.0
    %1353 = vmatprep.subr.mxu0 0.0
    %1354 = vmatpush1.msra.mxu0 0.0
    %1355 = vmatprep.subr.mxu0 0.0
    %1356 = vmatpush1.msra.mxu0 0.0
    %1357 = vmatprep.subr.mxu0 0.0
    %1358 = vmatpush1.msra.mxu0 0.0
    %1359 = vmatprep.subr.mxu0 0.0
    %1360 = vmatpush1.msra.mxu0 0.0
    %1361 = vmatprep.subr.mxu0 0.0
    %1362 = vmatpush1.msra.mxu0 0.0
    %1363 = vmatprep.subr.mxu0 0.0
    %1364 = vmatpush1.msra.mxu0 0.0
    %1365 = vmatprep.subr.mxu0 0.0
    %1366 = vmatpush1.msra.mxu0 0.0
    %1367 = vmatprep.subr.mxu0 0.0
    %1368 = vmatpush1.msra.mxu0 0.0
    %1369 = vmatprep.subr.mxu0 0.0
    %1370 = vmatpush1.msra.mxu0 0.0
    %1371 = vmatprep.subr.mxu0 0.0
    %1372 = vmatpush1.msra.mxu0 0.0
    %1373 = vmatprep.subr.mxu0 0.0
    %1374 = vmatpush1.msra.mxu0 0.0
    %1375 = vmatprep.mubr.f32.mxu0 0.0
    %1376 = vmatmul.mubr.f32.gmra.mrb[0].mxu0 %v1306
    %v1377 = vpop.f32.mrb[0].mxu0
    %v1378 = vadd.f32 0.0, %v1377
    %v1379 = vpop.f32.mrb[0].mxu0
    %1380 = vmatprep.mubr.f32.mxu0 0.0
    %1381 = vmatmul.mubr.f32.gmra.mrb[0].mxu0 %v1309
    %v1382 = vpop.f32.mrb[0].mxu0
    %v1383 = vadd.f32 0.0, %v1382
    %v1384 = vpop.f32.mrb[0].mxu0
    %1385 = vdwg.mxu0
    %v1387 = vsel %vm99, %v1378, 0
    %v1390 = vsel %vm99, %v1383, 0
    %1392 = vmatprep.subr.mxu0 0.0
    %1393 = vmatpush1.msra.mxu0 %v805
    %1394 = vmatprep.subr.mxu0 0.0
    %1395 = vmatpush1.msra.mxu0 %v806
    %1396 = vmatprep.subr.mxu0 0.0
    %1397 = vmatpush1.msra.mxu0 0.0
    %1398 = vmatprep.subr.mxu0 0.0
    %1399 = vmatpush1.msra.mxu0 0.0
    %1400 = vmatprep.subr.mxu0 0.0
    %1401 = vmatpush1.msra.mxu0 0.0
    %1402 = vmatprep.subr.mxu0 0.0
    %1403 = vmatpush1.msra.mxu0 0.0
    %1404 = vmatprep.subr.mxu0 0.0
    %1405 = vmatpush1.msra.mxu0 0.0
    %1406 = vmatprep.subr.mxu0 0.0
    %1407 = vmatpush1.msra.mxu0 0.0
    %1408 = vmatprep.subr.mxu0 0.0
    %1409 = vmatpush1.msra.mxu0 0.0
    %1410 = vmatprep.subr.mxu0 0.0
    %1411 = vmatpush1.msra.mxu0 0.0
    %1412 = vmatprep.subr.mxu0 0.0
    %1413 = vmatpush1.msra.mxu0 0.0
    %1414 = vmatprep.subr.mxu0 0.0
    %1415 = vmatpush1.msra.mxu0 0.0
    %1416 = vmatprep.subr.mxu0 0.0
    %1417 = vmatpush1.msra.mxu0 0.0
    %1418 = vmatprep.subr.mxu0 0.0
    %1419 = vmatpush1.msra.mxu0 0.0
    %1420 = vmatprep.subr.mxu0 0.0
    %1421 = vmatpush1.msra.mxu0 0.0
    %1422 = vmatprep.subr.mxu0 0.0
    %1423 = vmatpush1.msra.mxu0 0.0
    %1424 = vmatprep.subr.mxu0 0.0
    %1425 = vmatpush1.msra.mxu0 0.0
    %1426 = vmatprep.subr.mxu0 0.0
    %1427 = vmatpush1.msra.mxu0 0.0
    %1428 = vmatprep.subr.mxu0 0.0
    %1429 = vmatpush1.msra.mxu0 0.0
    %1430 = vmatprep.subr.mxu0 0.0
    %1431 = vmatpush1.msra.mxu0 0.0
    %1432 = vmatprep.subr.mxu0 0.0
    %1433 = vmatpush1.msra.mxu0 0.0
    %1434 = vmatprep.subr.mxu0 0.0
    %1435 = vmatpush1.msra.mxu0 0.0
    %1436 = vmatprep.subr.mxu0 0.0
    %1437 = vmatpush1.msra.mxu0 0.0
    %1438 = vmatprep.subr.mxu0 0.0
    %1439 = vmatpush1.msra.mxu0 0.0
    %1440 = vmatprep.subr.mxu0 0.0
    %1441 = vmatpush1.msra.mxu0 0.0
    %1442 = vmatprep.subr.mxu0 0.0
    %1443 = vmatpush1.msra.mxu0 0.0
    %1444 = vmatprep.subr.mxu0 0.0
    %1445 = vmatpush1.msra.mxu0 0.0
    %1446 = vmatprep.subr.mxu0 0.0
    %1447 = vmatpush1.msra.mxu0 0.0
    %1448 = vmatprep.subr.mxu0 0.0
    %1449 = vmatpush1.msra.mxu0 0.0
    %1450 = vmatprep.subr.mxu0 0.0
    %1451 = vmatpush1.msra.mxu0 0.0
    %1452 = vmatprep.subr.mxu0 0.0
    %1453 = vmatpush1.msra.mxu0 0.0
    %1454 = vmatprep.subr.mxu0 0.0
    %1455 = vmatpush1.msra.mxu0 0.0
    %1456 = vmatprep.mubr.f32.mxu0 0.0
    %1457 = vmatmul.mubr.f32.gmra.mrb[0].mxu0 %v1387
    %v1458 = vpop.f32.mrb[0].mxu0
    %v1459 = vadd.f32 0.0, %v1458
    %v1460 = vpop.f32.mrb[0].mxu0
    %1461 = vmatprep.mubr.f32.mxu0 0.0
    %1462 = vmatmul.mubr.f32.gmra.mrb[0].mxu0 %v1390
    %v1463 = vpop.f32.mrb[0].mxu0
    %v1464 = vadd.f32 0.0, %v1463
    %v1465 = vpop.f32.mrb[0].mxu0
    %1466 = vdwg.mxu0
    %v1468 = vsel %vm99, %v1169, 0
    %v1471 = vsel %vm99, %v1174, 0
    %1473 = vmatprep.subr.mxu0 0.0
    %1474 = vmatpush1.msra.mxu0 %v594
    %1475 = vmatprep.subr.mxu0 0.0
    %1476 = vmatpush1.msra.mxu0 %v595
    %1477 = vmatprep.subr.mxu0 0.0
    %1478 = vmatpush1.msra.mxu0 0.0
    %1479 = vmatprep.subr.mxu0 0.0
    %1480 = vmatpush1.msra.mxu0 0.0
    %1481 = vmatprep.subr.mxu0 0.0
    %1482 = vmatpush1.msra.mxu0 0.0
    %1483 = vmatprep.subr.mxu0 0.0
    %1484 = vmatpush1.msra.mxu0 0.0
    %1485 = vmatprep.subr.mxu0 0.0
    %1486 = vmatpush1.msra.mxu0 0.0
    %1487 = vmatprep.subr.mxu0 0.0
    %1488 = vmatpush1.msra.mxu0 0.0
    %1489 = vmatprep.subr.mxu0 0.0
    %1490 = vmatpush1.msra.mxu0 0.0
    %1491 = vmatprep.subr.mxu0 0.0
    %1492 = vmatpush1.msra.mxu0 0.0
    %1493 = vmatprep.subr.mxu0 0.0
    %1494 = vmatpush1.msra.mxu0 0.0
    %1495 = vmatprep.subr.mxu0 0.0
    %1496 = vmatpush1.msra.mxu0 0.0
    %1497 = vmatprep.subr.mxu0 0.0
    %1498 = vmatpush1.msra.mxu0 0.0
    %1499 = vmatprep.subr.mxu0 0.0
    %1500 = vmatpush1.msra.mxu0 0.0
    %1501 = vmatprep.subr.mxu0 0.0
    %1502 = vmatpush1.msra.mxu0 0.0
    %1503 = vmatprep.subr.mxu0 0.0
    %1504 = vmatpush1.msra.mxu0 0.0
    %1505 = vmatprep.subr.mxu0 0.0
    %1506 = vmatpush1.msra.mxu0 0.0
    %1507 = vmatprep.subr.mxu0 0.0
    %1508 = vmatpush1.msra.mxu0 0.0
    %1509 = vmatprep.subr.mxu0 0.0
    %1510 = vmatpush1.msra.mxu0 0.0
    %1511 = vmatprep.subr.mxu0 0.0
    %1512 = vmatpush1.msra.mxu0 0.0
    %1513 = vmatprep.subr.mxu0 0.0
    %1514 = vmatpush1.msra.mxu0 0.0
    %1515 = vmatprep.subr.mxu0 0.0
    %1516 = vmatpush1.msra.mxu0 0.0
    %1517 = vmatprep.subr.mxu0 0.0
    %1518 = vmatpush1.msra.mxu0 0.0
    %1519 = vmatprep.subr.mxu0 0.0
    %1520 = vmatpush1.msra.mxu0 0.0
    %1521 = vmatprep.subr.mxu0 0.0
    %1522 = vmatpush1.msra.mxu0 0.0
    %1523 = vmatprep.subr.mxu0 0.0
    %1524 = vmatpush1.msra.mxu0 0.0
    %1525 = vmatprep.subr.mxu0 0.0
    %1526 = vmatpush1.msra.mxu0 0.0
    %1527 = vmatprep.subr.mxu0 0.0
    %1528 = vmatpush1.msra.mxu0 0.0
    %1529 = vmatprep.subr.mxu0 0.0
    %1530 = vmatpush1.msra.mxu0 0.0
    %1531 = vmatprep.subr.mxu0 0.0
    %1532 = vmatpush1.msra.mxu0 0.0
    %1533 = vmatprep.subr.mxu0 0.0
    %1534 = vmatpush1.msra.mxu0 0.0
    %1535 = vmatprep.subr.mxu0 0.0
    %1536 = vmatpush1.msra.mxu0 0.0
    %1537 = vmatprep.mubr.f32.mxu0 0.0
    %1538 = vmatmul.mubr.f32.gmra.mrb[0].mxu0 %v1468
    %v1539 = vpop.f32.mrb[0].mxu0
    %v1540 = vadd.f32 %v1459, %v1539
    %v1541 = vpop.f32.mrb[0].mxu0
    %1542 = vmatprep.mubr.f32.mxu0 0.0
    %1543 = vmatmul.mubr.f32.gmra.mrb[0].mxu0 %v1471
    %v1544 = vpop.f32.mrb[0].mxu0
    %v1545 = vadd.f32 %v1464, %v1544
    %v1546 = vpop.f32.mrb[0].mxu0
    %1547 = vdwg.mxu0
    %v1548 = vld [vmem:[%s8] sm:$0x1]
    %v1550 = vlaneseq
    %v1551 = vshrl.u32 %v1550, 7
    %v1552 = vsub.s32 0, %v1551
    %v1553 = vrot.slane %v1548, %v1552
    %v1555 = vadd.f32 %v961, %v1553
    %v1556 = vadd.f32 %v966, %v1553
    %v1557 = vadd.f32 %v1540, %v1553
    %v1558 = vadd.f32 %v1545, %v1553
    %s1559 = sld [smem:[#allocation2]]
    %v1560 = vstv %s1559
    %v1561 = vmul.f32 %v1560, %v1555
    %v1562 = vmul.f32 %v1560, %v1556
    %v1563 = vmul.f32 %v1560, %v1557
    %v1564 = vmul.f32 %v1560, %v1558
    %v1565 = vadd.f32 %v84, %v1561
    %v1566 = vadd.f32 %v85, %v1562
    %v1567 = vadd.f32 %v86, %v1563
    %v1568 = vadd.f32 %v87, %v1564
    %v1569 = vsel %vm181, %v1565, 0.0
    %1570 = vadd.xlane.f32.xlu0 %v1569
    %v1571 = vpop.xlane.xlu0 %1570
    %v1572 = vsel %vm181, %v1566, 0.0
    %1573 = vadd.xlane.f32.xlu0 %v1572
    %v1574 = vpop.xlane.xlu0 %1573
    %v1575 = vsel %vm181, %v1567, 0.0
    %1576 = vadd.xlane.f32.xlu0 %v1575
    %v1577 = vpop.xlane.xlu0 %1576
    %v1578 = vsel %vm181, %v1568, 0.0
    %1579 = vadd.xlane.f32.xlu0 %v1578
    %v1580 = vpop.xlane.xlu0 %1579
    %v1581 = vmul.f32 %v1571, %v200
    %v1582 = vmul.f32 %v1574, %v200
    %v1583 = vmul.f32 %v1577, %v200
    %v1584 = vmul.f32 %v1580, %v200
    %v1585 = vsub.f32 %v1565, %v1581
    %v1586 = vsub.f32 %v1566, %v1582
    %v1587 = vsub.f32 %v1567, %v1583
    %v1588 = vsub.f32 %v1568, %v1584
    %v1589 = vmul.f32 %v1585, %v1585
    %v1590 = vmul.f32 %v1586, %v1586
    %v1591 = vmul.f32 %v1587, %v1587
    %v1592 = vmul.f32 %v1588, %v1588
    %v1593 = vsel %vm181, %v1589, 0.0
    %1594 = vadd.xlane.f32.xlu0 %v1593
    %v1595 = vpop.xlane.xlu0 %1594
    %v1596 = vsel %vm181, %v1590, 0.0
    %1597 = vadd.xlane.f32.xlu0 %v1596
    %v1598 = vpop.xlane.xlu0 %1597
    %v1599 = vsel %vm181, %v1591, 0.0
    %1600 = vadd.xlane.f32.xlu0 %v1599
    %v1601 = vpop.xlane.xlu0 %1600
    %v1602 = vsel %vm181, %v1592, 0.0
    %1603 = vadd.xlane.f32.xlu0 %v1602
    %v1604 = vpop.xlane.xlu0 %1603
    %v1605 = vmul.f32 %v1595, %v200
    %v1606 = vmul.f32 %v1598, %v200
    %v1607 = vmul.f32 %v1601, %v200
    %v1608 = vmul.f32 %v1604, %v200
    %v1609 = vadd.f32 %v1605, 1e-05
    %v1610 = vadd.f32 %v1606, 1e-05
    %v1611 = vadd.f32 %v1607, 1e-05
    %v1612 = vadd.f32 %v1608, 1e-05
    %v1613 = vrsqrt.pop %v1609
    %v1614 = vrsqrt.pop %v1610
    %v1615 = vrsqrt.pop %v1611
    %v1616 = vrsqrt.pop %v1612
    %v1617 = vmul.f32 %v1585, %v1613
    %v1618 = vmul.f32 %v1586, %v1614
    %v1619 = vmul.f32 %v1587, %v1615
    %v1620 = vmul.f32 %v1588, %v1616
    %v1621 = vld [vmem:[%s9] sm:$0xff]
    %v1622 = vld [vmem:[%s9 + $0x8] sm:$0xff]
    %v1623 = vld [vmem:[%s9 + $0x10] sm:$0xff]
    %v1624 = vld [vmem:[%s9 + $0x18] sm:$0xff]
    %v1625 = vld [vmem:[%s9 + $0x20] sm:$0xff]
    %v1626 = vld [vmem:[%s9 + $0x28] sm:$0xff]
    %v1627 = vld [vmem:[%s9 + $0x30] sm:$0xff]
    %v1628 = vld [vmem:[%s9 + $0x38] sm:$0xff]
    %v1629 = vld [vmem:[%s10] sm:$0x3]
    %v1631 = vlaneseq
    %v1632 = vshrl.u32 %v1631, 7
    %v1633 = vsub.s32 0, %v1632
    %v1634 = vrot.slane %v1629, %v1633
    %v1635 = vlaneseq
    %v1636 = vshrl.u32 %v1635, 7
    %v1637 = vsub.s32 1, %v1636
    %v1638 = vrot.slane %v1629, %v1637
    %v1642 = vsel %vm181, %v1617, 0
    %v1645 = vsel %vm181, %v1618, 0
    %v1648 = vsel %vm181, %v1619, 0
    %v1651 = vsel %vm181, %v1620, 0
    %1653 = vmatprep.subr.mxu0 %v1622
    %1654 = vmatpush1.msra.mxu0 %v1621
    %1655 = vmatprep.subr.mxu0 %v1624
    %1656 = vmatpush1.msra.mxu0 %v1623
    %1657 = vmatprep.subr.mxu0 %v1626
    %1658 = vmatpush1.msra.mxu0 %v1625
    %1659 = vmatprep.subr.mxu0 %v1628
    %1660 = vmatpush1.msra.mxu0 %v1627
    %1661 = vmatprep.subr.mxu0 0.0
    %1662 = vmatpush1.msra.mxu0 0.0
    %1663 = vmatprep.subr.mxu0 0.0
    %1664 = vmatpush1.msra.mxu0 0.0
    %1665 = vmatprep.subr.mxu0 0.0
    %1666 = vmatpush1.msra.mxu0 0.0
    %1667 = vmatprep.subr.mxu0 0.0
    %1668 = vmatpush1.msra.mxu0 0.0
    %1669 = vmatprep.subr.mxu0 0.0
    %1670 = vmatpush1.msra.mxu0 0.0
    %1671 = vmatprep.subr.mxu0 0.0
    %1672 = vmatpush1.msra.mxu0 0.0
    %1673 = vmatprep.subr.mxu0 0.0
    %1674 = vmatpush1.msra.mxu0 0.0
    %1675 = vmatprep.subr.mxu0 0.0
    %1676 = vmatpush1.msra.mxu0 0.0
    %1677 = vmatprep.subr.mxu0 0.0
    %1678 = vmatpush1.msra.mxu0 0.0
    %1679 = vmatprep.subr.mxu0 0.0
    %1680 = vmatpush1.msra.mxu0 0.0
    %1681 = vmatprep.subr.mxu0 0.0
    %1682 = vmatpush1.msra.mxu0 0.0
    %1683 = vmatprep.subr.mxu0 0.0
    %1684 = vmatpush1.msra.mxu0 0.0
    %1685 = vmatprep.subr.mxu0 0.0
    %1686 = vmatpush1.msra.mxu0 0.0
    %1687 = vmatprep.subr.mxu0 0.0
    %1688 = vmatpush1.msra.mxu0 0.0
    %1689 = vmatprep.subr.mxu0 0.0
    %1690 = vmatpush1.msra.mxu0 0.0
    %1691 = vmatprep.subr.mxu0 0.0
    %1692 = vmatpush1.msra.mxu0 0.0
    %1693 = vmatprep.subr.mxu0 0.0
    %1694 = vmatpush1.msra.mxu0 0.0
    %1695 = vmatprep.subr.mxu0 0.0
    %1696 = vmatpush1.msra.mxu0 0.0
    %1697 = vmatprep.subr.mxu0 0.0
    %1698 = vmatpush1.msra.mxu0 0.0
    %1699 = vmatprep.subr.mxu0 0.0
    %1700 = vmatpush1.msra.mxu0 0.0
    %1701 = vmatprep.subr.mxu0 0.0
    %1702 = vmatpush1.msra.mxu0 0.0
    %1703 = vmatprep.subr.mxu0 0.0
    %1704 = vmatpush1.msra.mxu0 0.0
    %1705 = vmatprep.subr.mxu0 0.0
    %1706 = vmatpush1.msra.mxu0 0.0
    %1707 = vmatprep.subr.mxu0 0.0
    %1708 = vmatpush1.msra.mxu0 0.0
    %1709 = vmatprep.subr.mxu0 0.0
    %1710 = vmatpush1.msra.mxu0 0.0
    %1711 = vmatprep.subr.mxu0 0.0
    %1712 = vmatpush1.msra.mxu0 0.0
    %1713 = vmatprep.subr.mxu0 0.0
    %1714 = vmatpush1.msra.mxu0 0.0
    %1715 = vmatprep.subr.mxu0 0.0
    %1716 = vmatpush1.msra.mxu0 0.0
    %1717 = vmatprep.mubr.f32.mxu0 0.0
    %1718 = vmatmul.mubr.f32.gmra.mrb[0].mxu0 %v1642
    %v1719 = vpop.f32.mrb[0].mxu0
    %v1720 = vadd.f32 %v1634, %v1719
    %v1721 = vpop.f32.mrb[0].mxu0
    %v1722 = vadd.f32 %v1638, %v1721
    %1723 = vmatprep.mubr.f32.mxu0 0.0
    %1724 = vmatmul.mubr.f32.gmra.mrb[0].mxu0 %v1645
    %v1725 = vpop.f32.mrb[0].mxu0
    %v1726 = vadd.f32 %v1634, %v1725
    %v1727 = vpop.f32.mrb[0].mxu0
    %v1728 = vadd.f32 %v1638, %v1727
    %1729 = vmatprep.mubr.f32.mxu0 0.0
    %1730 = vmatmul.mubr.f32.gmra.mrb[0].mxu0 %v1648
    %v1731 = vpop.f32.mrb[0].mxu0
    %v1732 = vadd.f32 %v1634, %v1731
    %v1733 = vpop.f32.mrb[0].mxu0
    %v1734 = vadd.f32 %v1638, %v1733
    %1735 = vmatprep.mubr.f32.mxu0 0.0
    %1736 = vmatmul.mubr.f32.gmra.mrb[0].mxu0 %v1651
    %v1737 = vpop.f32.mrb[0].mxu0
    %v1738 = vadd.f32 %v1634, %v1737
    %v1739 = vpop.f32.mrb[0].mxu0
    %v1740 = vadd.f32 %v1638, %v1739
    %1741 = vdwg.mxu0
    %v1742 = vmul.f32 %v1722, 0.5
    %v1743 = vmul.f32 %v1728, 0.5
    %v1744 = vmul.f32 %v1734, 0.5
    %v1745 = vmul.f32 %v1740, 0.5
    %v1746 = vmul.f32 %v1722, 0.70710677
    %v1747 = vmul.f32 %v1728, 0.70710677
    %v1748 = vmul.f32 %v1734, 0.70710677
    %v1749 = vmul.f32 %v1740, 0.70710677
    %v1750 = verf.f32.pop %v1746
    %v1751 = verf.f32.pop %v1747
    %v1752 = verf.f32.pop %v1748
    %v1753 = verf.f32.pop %v1749
    %v1754 = vadd.f32 %v1750, 1.0
    %v1755 = vadd.f32 %v1751, 1.0
    %v1756 = vadd.f32 %v1752, 1.0
    %v1757 = vadd.f32 %v1753, 1.0
    %v1758 = vmul.f32 %v1742, %v1754
    %v1759 = vmul.f32 %v1743, %v1755
    %v1760 = vmul.f32 %v1744, %v1756
    %v1761 = vmul.f32 %v1745, %v1757
    %v1762 = vmul.f32 %v1720, %v1758
    %v1763 = vmul.f32 %v1726, %v1759
    %v1764 = vmul.f32 %v1732, %v1760
    %v1765 = vmul.f32 %v1738, %v1761
    %v1766 = vld [vmem:[%s11] sm:$0xff]
    %v1767 = vld [vmem:[%s11 + $0x8] sm:$0xff]
    %v1768 = vld [vmem:[%s11 + $0x10] sm:$0xff]
    %v1769 = vld [vmem:[%s11 + $0x18] sm:$0xff]
    %v1770 = vld [vmem:[%s11 + $0x20] sm:$0xff]
    %v1771 = vld [vmem:[%s11 + $0x28] sm:$0xff]
    %v1772 = vld [vmem:[%s11 + $0x30] sm:$0xff]
    %v1773 = vld [vmem:[%s11 + $0x38] sm:$0xff]
    %v1774 = vld [vmem:[%s11 + $0x40] sm:$0xff]
    %v1775 = vld [vmem:[%s11 + $0x48] sm:$0xff]
    %v1776 = vld [vmem:[%s11 + $0x50] sm:$0xff]
    %v1777 = vld [vmem:[%s11 + $0x58] sm:$0xff]
    %v1778 = vld [vmem:[%s11 + $0x60] sm:$0xff]
    %v1779 = vld [vmem:[%s11 + $0x68] sm:$0xff]
    %v1780 = vld [vmem:[%s11 + $0x70] sm:$0xff]
    %v1781 = vld [vmem:[%s11 + $0x78] sm:$0xff]
    %v1782 = vld [vmem:[%s12] sm:$0x1]
    %v1784 = vlaneseq
    %v1785 = vshrl.u32 %v1784, 7
    %v1786 = vsub.s32 0, %v1785
    %v1787 = vrot.slane %v1782, %v1786
    %1789 = vmatprep.subr.mxu0 0.0
    %1790 = vmatpush1.msra.mxu0 %v1766
    %1791 = vmatprep.subr.mxu0 0.0
    %1792 = vmatpush1.msra.mxu0 %v1767
    %1793 = vmatprep.subr.mxu0 0.0
    %1794 = vmatpush1.msra.mxu0 %v1768
    %1795 = vmatprep.subr.mxu0 0.0
    %1796 = vmatpush1.msra.mxu0 %v1769
    %1797 = vmatprep.subr.mxu0 0.0
    %1798 = vmatpush1.msra.mxu0 %v1770
    %1799 = vmatprep.subr.mxu0 0.0
    %1800 = vmatpush1.msra.mxu0 %v1771
    %1801 = vmatprep.subr.mxu0 0.0
    %1802 = vmatpush1.msra.mxu0 %v1772
    %1803 = vmatprep.subr.mxu0 0.0
    %1804 = vmatpush1.msra.mxu0 %v1773
    %1805 = vmatprep.subr.mxu0 0.0
    %1806 = vmatpush1.msra.mxu0 %v1774
    %1807 = vmatprep.subr.mxu0 0.0
    %1808 = vmatpush1.msra.mxu0 %v1775
    %1809 = vmatprep.subr.mxu0 0.0
    %1810 = vmatpush1.msra.mxu0 %v1776
    %1811 = vmatprep.subr.mxu0 0.0
    %1812 = vmatpush1.msra.mxu0 %v1777
    %1813 = vmatprep.subr.mxu0 0.0
    %1814 = vmatpush1.msra.mxu0 %v1778
    %1815 = vmatprep.subr.mxu0 0.0
    %1816 = vmatpush1.msra.mxu0 %v1779
    %1817 = vmatprep.subr.mxu0 0.0
    %1818 = vmatpush1.msra.mxu0 %v1780
    %1819 = vmatprep.subr.mxu0 0.0
    %1820 = vmatpush1.msra.mxu0 %v1781
    %1821 = vmatprep.subr.mxu0 0.0
    %1822 = vmatpush1.msra.mxu0 0.0
    %1823 = vmatprep.subr.mxu0 0.0
    %1824 = vmatpush1.msra.mxu0 0.0
    %1825 = vmatprep.subr.mxu0 0.0
    %1826 = vmatpush1.msra.mxu0 0.0
    %1827 = vmatprep.subr.mxu0 0.0
    %1828 = vmatpush1.msra.mxu0 0.0
    %1829 = vmatprep.subr.mxu0 0.0
    %1830 = vmatpush1.msra.mxu0 0.0
    %1831 = vmatprep.subr.mxu0 0.0
    %1832 = vmatpush1.msra.mxu0 0.0
    %1833 = vmatprep.subr.mxu0 0.0
    %1834 = vmatpush1.msra.mxu0 0.0
    %1835 = vmatprep.subr.mxu0 0.0
    %1836 = vmatpush1.msra.mxu0 0.0
    %1837 = vmatprep.subr.mxu0 0.0
    %1838 = vmatpush1.msra.mxu0 0.0
    %1839 = vmatprep.subr.mxu0 0.0
    %1840 = vmatpush1.msra.mxu0 0.0
    %1841 = vmatprep.subr.mxu0 0.0
    %1842 = vmatpush1.msra.mxu0 0.0
    %1843 = vmatprep.subr.mxu0 0.0
    %1844 = vmatpush1.msra.mxu0 0.0
    %1845 = vmatprep.subr.mxu0 0.0
    %1846 = vmatpush1.msra.mxu0 0.0
    %1847 = vmatprep.subr.mxu0 0.0
    %1848 = vmatpush1.msra.mxu0 0.0
    %1849 = vmatprep.subr.mxu0 0.0
    %1850 = vmatpush1.msra.mxu0 0.0
    %1851 = vmatprep.subr.mxu0 0.0
    %1852 = vmatpush1.msra.mxu0 0.0
    %1853 = vmatprep.mubr.f32.mxu0 0.0
    %1854 = vmatmul.mubr.f32.gmra.mrb[0].mxu0 %v1762
    %v1855 = vpop.f32.mrb[0].mxu0
    %v1856 = vadd.f32 %v1787, %v1855
    %v1857 = vpop.f32.mrb[0].mxu0
    %1858 = vmatprep.mubr.f32.mxu0 0.0
    %1859 = vmatmul.mubr.f32.gmra.mrb[0].mxu0 %v1763
    %v1860 = vpop.f32.mrb[0].mxu0
    %v1861 = vadd.f32 %v1787, %v1860
    %v1862 = vpop.f32.mrb[0].mxu0
    %1863 = vmatprep.mubr.f32.mxu0 0.0
    %1864 = vmatmul.mubr.f32.gmra.mrb[0].mxu0 %v1764
    %v1865 = vpop.f32.mrb[0].mxu0
    %v1866 = vadd.f32 %v1787, %v1865
    %v1867 = vpop.f32.mrb[0].mxu0
    %1868 = vmatprep.mubr.f32.mxu0 0.0
    %1869 = vmatmul.mubr.f32.gmra.mrb[0].mxu0 %v1765
    %v1870 = vpop.f32.mrb[0].mxu0
    %v1871 = vadd.f32 %v1787, %v1870
    %v1872 = vpop.f32.mrb[0].mxu0
    %1873 = vdwg.mxu0
    %s1874 = sld [smem:[#allocation2 + $0x1]]
    %v1875 = vstv %s1874
    %v1876 = vmul.f32 %v1875, %v1856
    %v1877 = vmul.f32 %v1875, %v1861
    %v1878 = vmul.f32 %v1875, %v1866
    %v1879 = vmul.f32 %v1875, %v1871
    %v1880 = vadd.f32 %v1565, %v1876
    %v1881 = vadd.f32 %v1566, %v1877
    %v1882 = vadd.f32 %v1567, %v1878
    %v1883 = vadd.f32 %v1568, %v1879
    %1884 = vst.msk [vmem:[#allocation9] sm:$0xff] %vm181, %v1880
    %1885 = vst.msk [vmem:[#allocation9 + $0x8] sm:$0xff] %vm181, %v1881
    %1886 = vst.msk [vmem:[#allocation9 + $0x10] sm:$0xff] %vm181, %v1882
    %1887 = vst.msk [vmem:[#allocation9 + $0x18] sm:$0xff] %vm181, %v1883
    // Predicated region
    $region66: #{tpu_custom_call.1} parent=1 // pred_check
      _
    $region67: #{tpu_custom_call.1} parent=1 // pred_check_branch
      %1889 = sbr.rel (0) target = $region69
    $region68: #{tpu_custom_call.1} parent=1 // pred_region
      %s1891 = ssub.s32 512, 512
      %1892 = vsyncadd [#allocation4], %s1891
      %s1893 = sshll.u32 [#allocation9], 4
      %s1894 = int_to_ptr.vmem [resolvable:$true] %s1893
      %1899 = dma.vmem_to_hbm [thread:$0]  %s1894, 512, %s13, [#allocation4], 128, 128, 8
    $region69: #{tpu_custom_call.1} parent=1 // pred_fallthru
      _
    // Predicated region
    $region70: #{tpu_custom_call.1} parent=1 // pred_check
      _
    $region71: #{tpu_custom_call.1} parent=1 // pred_check_branch
      %1901 = sbr.rel (0) target = $region73
    $region72: #{tpu_custom_call.1} parent=1 // pred_region
      %1902 = dma.done [#allocation4], 512
    $region73: #{tpu_custom_call.1} parent=1 // pred_fallthru
      _
    %1903 = vsyncpa [#allocation3], 1
    %1904 = vsyncpa [#allocation8], 1
    %1905 = vsyncpa [#allocation4], 1
    %1906 = vsyncpa [#allocation5], 1

</llo_original>
